<compile_context>
chip_gen: v7x
topology: tpu7x:2x2x1
jax: 0.10.0
libtpu: 0.0.40
codegen_flags: <defaults>
</compile_context>

<pallas_src>
import jax
import jax.numpy as jnp
from jax.experimental import pallas as pl
from jax.experimental.pallas import tpu as pltpu


def _make_bilstm_kernel(Tc, Bt, D, H, Tp, nc, unroll):
    """Build the bidirectional-LSTM recurrence kernel for static sizes."""
    G4 = 4 * H      # gates per direction (i, f, g, o)
    G8 = 8 * H      # both directions side by side

    def kernel(lens_ref, xf_ref, xb_ref, wx_ref, wh_ref, b_ref, out_ref,
               gxf_ref, gxb_ref, hc_ref, cc_ref):
        # lens_ref : [Bt, 1] int32 valid lengths
        # xf_ref   : [Tc*Bt, D] forward time chunk (rows = t*Bt + b)
        # xb_ref   : [Tc*Bt, D] chunk taken from the reverse end of the sequence
        # wx_ref   : [D, 8H]  = [W_ih_f^T | W_ih_b^T]
        # wh_ref   : [H, 8H]  = [W_hh_f^T | W_hh_b^T]
        # b_ref    : [1, 8H]  = [b_f | b_b]  (b_ih + b_hh per direction)
        # out_ref  : [Bt, 2H] = [h_fwd_final | h_bwd_final]
        c = pl.program_id(1)

        # ---- per-chunk bulk input projection (two big MXU ops, bias folded in),
        #      kept off the serial recurrence chain.
        bias = b_ref[...]                                          # (1, 8H)
        gxf_ref[...] = jnp.dot(xf_ref[...], wx_ref[...],
                               preferred_element_type=jnp.float32) + bias
        gxb_ref[...] = jnp.dot(xb_ref[...], wx_ref[...],
                               preferred_element_type=jnp.float32) + bias

        # ---- hoisted loop invariants (live in vregs across the time loop)
        wh = wh_ref[...]                                           # (H, 8H)
        lens = lens_ref[...]                                       # (Bt, 1)
        lens2 = jnp.concatenate([lens, lens], axis=0)              # (2Bt, 1)
        row = jax.lax.broadcasted_iota(jnp.int32, (2 * Bt, 1), 0)
        is_fwd = row < Bt                                          # rows 0:Bt fwd
        lane = jax.lax.broadcasted_iota(jnp.int32, (2 * Bt, G8), 1)
        lmod = lane % G4
        is_tanh = (lmod >= 2 * H) & (lmod < 3 * H)                 # g-gate lanes

        @pl.when(c == 0)
        def _():
            hc_ref[...] = jnp.zeros((2 * Bt, H), jnp.float32)
            cc_ref[...] = jnp.zeros((2 * Bt, H), jnp.float32)

        def step(lt, carry):
            h_cat, c_cat = carry                                   # (2Bt, H) vregs
            rf = pl.multiple_of(lt * Bt, Bt)
            rb = pl.multiple_of((Tc - 1 - lt) * Bt, Bt)
            gx_t = jnp.concatenate(
                [gxf_ref[pl.ds(rf, Bt), :], gxb_ref[pl.ds(rb, Bt), :]], axis=0)
            # one fused matmul per step for both directions (block weights)
            gates = gx_t + jnp.dot(h_cat, wh,
                                   preferred_element_type=jnp.float32)  # (2Bt, 8H)
            # full-vreg nonlinearities: tanh on g lanes, sigmoid elsewhere
            act = jnp.where(is_tanh, jnp.tanh(gates), jax.nn.sigmoid(gates))
            # diagonal blocks: fwd rows use cols [0,4H), bwd rows use cols [4H,8H)
            g = jnp.where(is_fwd, act[:, :G4], act[:, G4:])        # (2Bt, 4H)
            i_g = g[:, 0:H]
            f_g = g[:, H:2 * H]
            g_g = g[:, 2 * H:3 * H]
            o_g = g[:, 3 * H:4 * H]
            c_new = f_g * c_cat + i_g * g_g
            h_new = o_g * jnp.tanh(c_new)
            # packed-sequence masking: fwd freezes past len; bwd skips padded tail
            t_f = c * Tc + lt
            t_b = Tp - 1 - t_f
            t_row = jnp.where(is_fwd, t_f, t_b)                    # (2Bt, 1)
            valid = t_row < lens2
            h_cat = jnp.where(valid, h_new, h_cat)
            c_cat = jnp.where(valid, c_new, c_cat)
            return h_cat, c_cat

        h_cat, c_cat = jax.lax.fori_loop(
            0, Tc, step, (hc_ref[...], cc_ref[...]), unroll=unroll)
        hc_ref[...] = h_cat
        cc_ref[...] = c_cat

        @pl.when(c == nc - 1)
        def _():
            # single lane-dense store of [h_fwd_final | h_bwd_final]
            out_ref[...] = jnp.concatenate([h_cat[:Bt, :], h_cat[Bt:, :]], axis=1)

    return kernel


class BotDetectRnnPallas:
    """JAX/Pallas port of BotDetectRnn.forward (num_layers=1, bidirectional)."""

    def __init__(self, vocab_size, input_size, hidden_size, padding_idx,
                 num_layers=1, seed=0):
        assert num_layers == 1, "only num_layers=1 implemented"
        self.vocab_size = vocab_size
        self.input_size = input_size
        self.hidden_size = hidden_size
        self.padding_idx = padding_idx

        key = jax.random.PRNGKey(seed)
        ks = jax.random.split(key, 9)
        k = 1.0 / jnp.sqrt(hidden_size)

        emb = jax.random.normal(ks[0], (vocab_size, input_size), jnp.float32)
        emb = emb.at[padding_idx].set(0.0)   # nn.Embedding padding_idx row is zero
        self.emb = emb

        def u(key, shape):
            return jax.random.uniform(key, shape, jnp.float32, -k, k)

        H, D = hidden_size, input_size
        # PyTorch LSTM parameter shapes (gate order i, f, g, o).
        self.w_ih_f = u(ks[1], (4 * H, D))
        self.w_hh_f = u(ks[2], (4 * H, H))
        self.b_ih_f = u(ks[3], (4 * H,))
        self.b_hh_f = u(ks[4], (4 * H,))
        self.w_ih_b = u(ks[5], (4 * H, D))
        self.w_hh_b = u(ks[6], (4 * H, H))
        self.b_ih_b = u(ks[7], (4 * H,))
        self.b_hh_b = u(ks[8], (4 * H,))

    def __call__(self, x, x_lens):
        # x: int32 [B, T] token ids; x_lens: int32 [B] (right-padded sequences)
        B, T = x.shape
        H, D = self.hidden_size, self.input_size

        Bt = 8                                   # f32 sublane tile
        Bp = pl.cdiv(B, Bt) * Bt
        nb = Bp // Bt
        Tc = T if T <= 32 else 32                # time-chunk (pipelined grid axis)
        Tp = pl.cdiv(T, Tc) * Tc
        nc = Tp // Tc
        unroll = Tc if Tc <= 16 else 8

        x = x.astype(jnp.int32)
        x_p = jnp.full((Bp, Tp), self.padding_idx, jnp.int32).at[:B, :T].set(x)
        lens_p = jnp.zeros((Bp, 1), jnp.int32).at[:B, 0].set(
            x_lens.astype(jnp.int32))

        # Embedding gather emitted directly in (batch-tile, time, batch, D) layout
        # (no extra transpose pass over the embedded activations).
        tok_g = x_p.reshape(nb, Bt, Tp).transpose(0, 2, 1)      # (nb, Tp, Bt)
        x_g = self.emb[tok_g].reshape(nb, Tp * Bt, D)           # (nb, Tp*Bt, D)

        # Fused weight layout: columns 0:4H = forward gates, 4H:8H = backward gates.
        wx = jnp.concatenate([self.w_ih_f.T, self.w_ih_b.T], axis=1)   # (D, 8H)
        wh = jnp.concatenate([self.w_hh_f.T, self.w_hh_b.T], axis=1)   # (H, 8H)
        bias = jnp.concatenate([self.b_ih_f + self.b_hh_f,
                                self.b_ih_b + self.b_hh_b]).reshape(1, 8 * H)

        kernel = _make_bilstm_kernel(Tc, Bt, D, H, Tp, nc, unroll)

        grid_spec = pltpu.PrefetchScalarGridSpec(
            num_scalar_prefetch=0,
            grid=(nb, nc),
            in_specs=[
                pl.BlockSpec((Bt, 1), lambda b, c: (b, 0)),                  # lens
                pl.BlockSpec((None, Tc * Bt, D), lambda b, c: (b, c, 0)),    # x fwd
                pl.BlockSpec((None, Tc * Bt, D),
                             lambda b, c: (b, nc - 1 - c, 0)),               # x bwd
                pl.BlockSpec((D, 8 * H), lambda b, c: (0, 0)),               # wx
                pl.BlockSpec((H, 8 * H), lambda b, c: (0, 0)),               # wh
                pl.BlockSpec((1, 8 * H), lambda b, c: (0, 0)),               # bias
            ],
            out_specs=pl.BlockSpec((Bt, 2 * H), lambda b, c: (b, 0)),
            scratch_shapes=[
                pltpu.VMEM((Tc * Bt, 8 * H), jnp.float32),   # fwd x-projection
                pltpu.VMEM((Tc * Bt, 8 * H), jnp.float32),   # bwd x-projection
                pltpu.VMEM((2 * Bt, H), jnp.float32),        # h carry across chunks
                pltpu.VMEM((2 * Bt, H), jnp.float32),        # c carry across chunks
            ],
        )

        out = pl.pallas_call(
            kernel,
            out_shape=jax.ShapeDtypeStruct((Bp, 2 * H), jnp.float32),
            grid_spec=grid_spec,
            compiler_params=pltpu.CompilerParams(
                dimension_semantics=("parallel", "arbitrary")),
        )(lens_p, x_g, x_g, wx, wh, bias)
        return out[:B]

    # Pure-JAX reference (same math, no Pallas) used as a correctness check.
    def reference(self, x, x_lens):
        B, T = x.shape
        H = self.hidden_size
        emb = self.emb[x]
        lens = x_lens.astype(jnp.int32)

        def cell(x_t, h, c, wih, whh, b):
            gates = x_t @ wih.T + h @ whh.T + b
            i = jax.nn.sigmoid(gates[:, :H])
            f = jax.nn.sigmoid(gates[:, H:2 * H])
            g = jnp.tanh(gates[:, 2 * H:3 * H])
            o = jax.nn.sigmoid(gates[:, 3 * H:])
            c_new = f * c + i * g
            return o * jnp.tanh(c_new), c_new

        hf = cf = hb = cb = jnp.zeros((B, H), jnp.float32)
        bf = self.b_ih_f + self.b_hh_f
        bb = self.b_ih_b + self.b_hh_b
        for t in range(T):
            hn, cn = cell(emb[:, t], hf, cf, self.w_ih_f, self.w_hh_f, bf)
            m = (t < lens)[:, None]
            hf = jnp.where(m, hn, hf)
            cf = jnp.where(m, cn, cf)
            tb = T - 1 - t
            hn, cn = cell(emb[:, tb], hb, cb, self.w_ih_b, self.w_hh_b, bb)
            m = (tb < lens)[:, None]
            hb = jnp.where(m, hn, hb)
            cb = jnp.where(m, cn, cb)
        return jnp.concatenate([hf, hb], axis=1)


if __name__ == "__main__":
    vocab_size, input_size, hidden_size, padding_idx = 50, 16, 32, 0
    B, T = 2, 8

    model = BotDetectRnnPallas(vocab_size, input_size, hidden_size, padding_idx,
                               seed=0)

    key = jax.random.PRNGKey(0)
    k_tok, _ = jax.random.split(key)
    x_lens = jnp.array([8, 5], dtype=jnp.int32)  # descending, as pack_padded_sequence expects
    x = jax.random.randint(k_tok, (B, T), 1, vocab_size, dtype=jnp.int32)
    # pad positions past the valid length with padding_idx
    pos = jnp.arange(T)[None, :]
    x = jnp.where(pos < x_lens[:, None], x, padding_idx)

    out = model(x, x_lens)
    out = jax.block_until_ready(out)

    ref = model.reference(x, x_lens)
    assert out.shape == (B, 2 * hidden_size)
    assert jnp.allclose(out, ref, atol=1e-4, rtol=1e-4), "Pallas output mismatch vs reference"

    print("KERNEL_OK")
</pallas_src>

<mosaic_0001>
module attributes {stable_mosaic.version = 11 : i64} {
  func.func @kernel(%arg0: i32, %arg1: i32, %arg2: memref<8x1xi32, #tpu.memory_space<vmem>>, %arg3: memref<1x64x16xf32, #tpu.memory_space<vmem>>, %arg4: memref<1x64x16xf32, #tpu.memory_space<vmem>>, %arg5: memref<16x256xf32, #tpu.memory_space<vmem>>, %arg6: memref<32x256xf32, #tpu.memory_space<vmem>>, %arg7: memref<1x256xf32, #tpu.memory_space<vmem>>, %arg8: memref<8x64xf32, #tpu.memory_space<vmem>>, %arg9: memref<64x256xf32, #tpu.memory_space<vmem>>, %arg10: memref<64x256xf32, #tpu.memory_space<vmem>>, %arg11: memref<16x32xf32, #tpu.memory_space<vmem>>, %arg12: memref<16x32xf32, #tpu.memory_space<vmem>>) attributes {dimension_semantics = [#tpu.dimension_semantics<parallel>, #tpu.dimension_semantics<arbitrary>], iteration_bounds = array<i64: 1, 1>, scalar_prefetch = 0 : i64, scratch_operands = 4 : i64, tpu.core_type = #tpu.core_type<tc>, window_params = [{transform_indices = @transform_0, window_bounds = array<i64: 8, 1>}, {transform_indices = @transform_1, window_bounds = array<i64: 1, 64, 16>}, {transform_indices = @transform_2, window_bounds = array<i64: 1, 64, 16>}, {pipeline_mode = #tpu.pipeline_mode<synchronous>, transform_indices = @transform_3, window_bounds = array<i64: 16, 256>}, {pipeline_mode = #tpu.pipeline_mode<synchronous>, transform_indices = @transform_4, window_bounds = array<i64: 32, 256>}, {pipeline_mode = #tpu.pipeline_mode<synchronous>, transform_indices = @transform_5, window_bounds = array<i64: 1, 256>}, {transform_indices = @transform_6, window_bounds = array<i64: 8, 64>}]} {
    %c0 = arith.constant 0 : index
    %c0_0 = arith.constant 0 : index
    %0 = vector.load %arg7[%c0, %c0_0] : memref<1x256xf32, #tpu.memory_space<vmem>>, vector<1x256xf32>
    %c0_1 = arith.constant 0 : index
    %c0_2 = arith.constant 0 : index
    %c0_3 = arith.constant 0 : index
    %1 = vector.load %arg3[%c0_1, %c0_2, %c0_3] : memref<1x64x16xf32, #tpu.memory_space<vmem>>, vector<1x64x16xf32>
    %2 = vector.shape_cast %1 : vector<1x64x16xf32> to vector<64x16xf32>
    %c0_4 = arith.constant 0 : index
    %c0_5 = arith.constant 0 : index
    %3 = vector.load %arg5[%c0_4, %c0_5] : memref<16x256xf32, #tpu.memory_space<vmem>>, vector<16x256xf32>
    %cst = arith.constant dense<0.000000e+00> : vector<64x256xf32>
    %4 = tpu.matmul %2, %3, %cst {dimension_numbers = #tpu.dot_dimension_numbers<[1], [0], [0], [1], [0, 0, 1, 1], [], []>} : vector<64x16xf32>, vector<16x256xf32>, vector<64x256xf32> -> vector<64x256xf32>
    %5 = vector.broadcast %0 : vector<1x256xf32> to vector<64x256xf32>
    %6 = arith.addf %4, %5 : vector<64x256xf32>
    %c0_6 = arith.constant 0 : index
    %c0_7 = arith.constant 0 : index
    %7 = vector.load %arg9[%c0_6, %c0_7] : memref<64x256xf32, #tpu.memory_space<vmem>>, vector<64x256xf32>
    tpu.vector_store %arg9[%c0_6, %c0_7], %6 {strides = array<i32>} : memref<64x256xf32, #tpu.memory_space<vmem>>, vector<64x256xf32>,
    %c0_8 = arith.constant 0 : index
    %c0_9 = arith.constant 0 : index
    %c0_10 = arith.constant 0 : index
    %8 = vector.load %arg4[%c0_8, %c0_9, %c0_10] : memref<1x64x16xf32, #tpu.memory_space<vmem>>, vector<1x64x16xf32>
    %9 = vector.shape_cast %8 : vector<1x64x16xf32> to vector<64x16xf32>
    %c0_11 = arith.constant 0 : index
    %c0_12 = arith.constant 0 : index
    %10 = vector.load %arg5[%c0_11, %c0_12] : memref<16x256xf32, #tpu.memory_space<vmem>>, vector<16x256xf32>
    %cst_13 = arith.constant dense<0.000000e+00> : vector<64x256xf32>
    %11 = tpu.matmul %9, %10, %cst_13 {dimension_numbers = #tpu.dot_dimension_numbers<[1], [0], [0], [1], [0, 0, 1, 1], [], []>} : vector<64x16xf32>, vector<16x256xf32>, vector<64x256xf32> -> vector<64x256xf32>
    %12 = vector.broadcast %0 : vector<1x256xf32> to vector<64x256xf32>
    %13 = arith.addf %11, %12 : vector<64x256xf32>
    %c0_14 = arith.constant 0 : index
    %c0_15 = arith.constant 0 : index
    %14 = vector.load %arg10[%c0_14, %c0_15] : memref<64x256xf32, #tpu.memory_space<vmem>>, vector<64x256xf32>
    tpu.vector_store %arg10[%c0_14, %c0_15], %13 {strides = array<i32>} : memref<64x256xf32, #tpu.memory_space<vmem>>, vector<64x256xf32>,
    %c0_16 = arith.constant 0 : index
    %c0_17 = arith.constant 0 : index
    %15 = vector.load %arg6[%c0_16, %c0_17] : memref<32x256xf32, #tpu.memory_space<vmem>>, vector<32x256xf32>
    %c0_18 = arith.constant 0 : index
    %c0_19 = arith.constant 0 : index
    %16 = vector.load %arg2[%c0_18, %c0_19] : memref<8x1xi32, #tpu.memory_space<vmem>>, vector<8x1xi32>
    %17 = tpu.concatenate %16, %16 in 0 : vector<8x1xi32>, vector<8x1xi32> -> vector<16x1xi32>
    %18 = tpu.iota {dimensions = array<i32: 0>} : vector<16x1xi32>
    %c8_i32 = arith.constant 8 : i32
    %19 = vector.broadcast %c8_i32 : i32 to vector<16x1xi32>
    %20 = arith.cmpi slt, %18, %19 : vector<16x1xi32>
    %21 = tpu.iota {dimensions = array<i32: 1>} : vector<16x256xi32>
    %c128_i32 = arith.constant 128 : i32
    %c0_i32 = arith.constant 0 : i32
    %22 = arith.cmpi eq, %c128_i32, %c0_i32 : i32
    %c1_i32 = arith.constant 1 : i32
    %23 = arith.select %22, %c1_i32, %c128_i32 : i32
    %24 = vector.broadcast %23 : i32 to vector<16x256xi32>
    %25 = arith.remsi %21, %24 : vector<16x256xi32>
    %c0_i32_20 = arith.constant 0 : i32
    %26 = vector.broadcast %c0_i32_20 : i32 to vector<16x256xi32>
    %27 = arith.cmpi ne, %25, %26 : vector<16x256xi32>
    %c0_i32_21 = arith.constant 0 : i32
    %28 = vector.broadcast %c0_i32_21 : i32 to vector<16x256xi32>
    %29 = arith.cmpi slt, %25, %28 : vector<16x256xi32>
    %c0_i32_22 = arith.constant 0 : i32
    %30 = arith.cmpi slt, %23, %c0_i32_22 : i32
    %31 = vector.broadcast %30 : i1 to vector<16x256xi1>
    %32 = vector.broadcast %31 : vector<16x256xi1> to vector<16x256xi1>
    %33 = arith.xori %29, %32 : vector<16x256xi1>
    %34 = arith.andi %33, %27 : vector<16x256xi1>
    %35 = vector.broadcast %23 : i32 to vector<16x256xi32>
    %36 = arith.addi %25, %35 : vector<16x256xi32>
    %37 = arith.select %34, %36, %25 : vector<16x256xi1>, vector<16x256xi32>
    %c64_i32 = arith.constant 64 : i32
    %38 = vector.broadcast %c64_i32 : i32 to vector<16x256xi32>
    %39 = arith.cmpi sge, %37, %38 : vector<16x256xi32>
    %c96_i32 = arith.constant 96 : i32
    %40 = vector.broadcast %c96_i32 : i32 to vector<16x256xi32>
    %41 = arith.cmpi slt, %37, %40 : vector<16x256xi32>
    %42 = arith.andi %39, %41 : vector<16x256xi1>
    %c0_i32_23 = arith.constant 0 : i32
    %43 = arith.cmpi eq, %arg1, %c0_i32_23 : i32
    %44 = arith.extui %43 : i1 to i32
    %c0_i32_24 = arith.constant 0 : i32
    %45 = arith.cmpi ne, %44, %c0_i32_24 : i32
    scf.if %45 {
      %cst_110 = arith.constant 0.000000e+00 : f32
      %421 = vector.broadcast %cst_110 : f32 to vector<16x32xf32>
      %c0_111 = arith.constant 0 : index
      %c0_112 = arith.constant 0 : index
      %422 = vector.load %arg11[%c0_111, %c0_112] : memref<16x32xf32, #tpu.memory_space<vmem>>, vector<16x32xf32>
      tpu.vector_store %arg11[%c0_111, %c0_112], %421 {strides = array<i32>} : memref<16x32xf32, #tpu.memory_space<vmem>>, vector<16x32xf32>,
      %cst_113 = arith.constant 0.000000e+00 : f32
      %423 = vector.broadcast %cst_113 : f32 to vector<16x32xf32>
      %c0_114 = arith.constant 0 : index
      %c0_115 = arith.constant 0 : index
      %424 = vector.load %arg12[%c0_114, %c0_115] : memref<16x32xf32, #tpu.memory_space<vmem>>, vector<16x32xf32>
      tpu.vector_store %arg12[%c0_114, %c0_115], %423 {strides = array<i32>} : memref<16x32xf32, #tpu.memory_space<vmem>>, vector<16x32xf32>,
    } else {
    }
    %c0_25 = arith.constant 0 : index
    %c0_26 = arith.constant 0 : index
    %46 = vector.load %arg11[%c0_25, %c0_26] : memref<16x32xf32, #tpu.memory_space<vmem>>, vector<16x32xf32>
    %c0_27 = arith.constant 0 : index
    %c0_28 = arith.constant 0 : index
    %47 = vector.load %arg12[%c0_27, %c0_28] : memref<16x32xf32, #tpu.memory_space<vmem>>, vector<16x32xf32>
    %c0_i32_29 = arith.constant 0 : i32
    %c8_i32_30 = arith.constant 8 : i32
    %48 = arith.muli %c0_i32_29, %c8_i32_30 : i32
    %49 = tpu.assume_multiple %48, 8 : i32
    %c7_i32 = arith.constant 7 : i32
    %50 = arith.subi %c7_i32, %c0_i32_29 : i32
    %c8_i32_31 = arith.constant 8 : i32
    %51 = arith.muli %50, %c8_i32_31 : i32
    %52 = tpu.assume_multiple %51, 8 : i32
    %53 = arith.index_cast %49 : i32 to index
    %c0_32 = arith.constant 0 : index
    %54 = vector.load %arg9[%53, %c0_32] : memref<64x256xf32, #tpu.memory_space<vmem>>, vector<8x256xf32>
    %55 = arith.index_cast %52 : i32 to index
    %c0_33 = arith.constant 0 : index
    %56 = vector.load %arg10[%55, %c0_33] : memref<64x256xf32, #tpu.memory_space<vmem>>, vector<8x256xf32>
    %57 = tpu.concatenate %54, %56 in 0 : vector<8x256xf32>, vector<8x256xf32> -> vector<16x256xf32>
    %cst_34 = arith.constant dense<0.000000e+00> : vector<16x256xf32>
    %58 = tpu.matmul %46, %15, %cst_34 {dimension_numbers = #tpu.dot_dimension_numbers<[1], [0], [0], [1], [0, 0, 1, 1], [], []>} : vector<16x32xf32>, vector<32x256xf32>, vector<16x256xf32> -> vector<16x256xf32>
    %59 = arith.addf %57, %58 : vector<16x256xf32>
    %60 = math.tanh %59 : vector<16x256xf32>
    %61 = arith.negf %59 : vector<16x256xf32>
    %62 = math.exp %61 : vector<16x256xf32>
    %cst_35 = arith.constant 1.000000e+00 : f32
    %63 = vector.broadcast %cst_35 : f32 to vector<16x256xf32>
    %64 = arith.addf %63, %62 : vector<16x256xf32>
    %65 = arith.divf %63, %64 : vector<16x256xf32>
    %66 = arith.select %42, %60, %65 : vector<16x256xi1>, vector<16x256xf32>
    %67 = vector.extract_strided_slice %66 {offsets = [0, 0], sizes = [16, 128], strides = [1, 1]} : vector<16x256xf32> to vector<16x128xf32>
    %68 = vector.extract_strided_slice %66 {offsets = [0, 128], sizes = [16, 128], strides = [1, 1]} : vector<16x256xf32> to vector<16x128xf32>
    %69 = vector.shape_cast %20 : vector<16x1xi1> to vector<16x1xi1>
    %70 = vector.broadcast %69 : vector<16x1xi1> to vector<16x128xi1>
    %71 = arith.select %70, %67, %68 : vector<16x128xi1>, vector<16x128xf32>
    %72 = vector.extract_strided_slice %71 {offsets = [0, 0], sizes = [16, 32], strides = [1, 1]} : vector<16x128xf32> to vector<16x32xf32>
    %73 = vector.extract_strided_slice %71 {offsets = [0, 32], sizes = [16, 32], strides = [1, 1]} : vector<16x128xf32> to vector<16x32xf32>
    %74 = vector.extract_strided_slice %71 {offsets = [0, 64], sizes = [16, 32], strides = [1, 1]} : vector<16x128xf32> to vector<16x32xf32>
    %75 = vector.extract_strided_slice %71 {offsets = [0, 96], sizes = [16, 32], strides = [1, 1]} : vector<16x128xf32> to vector<16x32xf32>
    %76 = arith.mulf %73, %47 : vector<16x32xf32>
    %77 = arith.mulf %72, %74 : vector<16x32xf32>
    %78 = arith.addf %76, %77 : vector<16x32xf32>
    %79 = math.tanh %78 : vector<16x32xf32>
    %80 = arith.mulf %75, %79 : vector<16x32xf32>
    %c8_i32_36 = arith.constant 8 : i32
    %81 = arith.muli %arg1, %c8_i32_36 : i32
    %82 = arith.addi %81, %c0_i32_29 : i32
    %c7_i32_37 = arith.constant 7 : i32
    %83 = arith.subi %c7_i32_37, %82 : i32
    %84 = vector.broadcast %82 : i32 to vector<16x1xi32>
    %85 = vector.broadcast %83 : i32 to vector<16x1xi32>
    %86 = arith.select %20, %84, %85 : vector<16x1xi1>, vector<16x1xi32>
    %87 = arith.cmpi slt, %86, %17 : vector<16x1xi32>
    %88 = vector.shape_cast %87 : vector<16x1xi1> to vector<16x1xi1>
    %89 = vector.broadcast %88 : vector<16x1xi1> to vector<16x32xi1>
    %90 = arith.select %89, %80, %46 : vector<16x32xi1>, vector<16x32xf32>
    %91 = vector.shape_cast %87 : vector<16x1xi1> to vector<16x1xi1>
    %92 = vector.broadcast %91 : vector<16x1xi1> to vector<16x32xi1>
    %93 = arith.select %92, %78, %47 : vector<16x32xi1>, vector<16x32xf32>
    %c1_i32_38 = arith.constant 1 : i32
    %c8_i32_39 = arith.constant 8 : i32
    %94 = arith.muli %c1_i32_38, %c8_i32_39 : i32
    %95 = tpu.assume_multiple %94, 8 : i32
    %c7_i32_40 = arith.constant 7 : i32
    %96 = arith.subi %c7_i32_40, %c1_i32_38 : i32
    %c8_i32_41 = arith.constant 8 : i32
    %97 = arith.muli %96, %c8_i32_41 : i32
    %98 = tpu.assume_multiple %97, 8 : i32
    %99 = arith.index_cast %95 : i32 to index
    %c0_42 = arith.constant 0 : index
    %100 = vector.load %arg9[%99, %c0_42] : memref<64x256xf32, #tpu.memory_space<vmem>>, vector<8x256xf32>
    %101 = arith.index_cast %98 : i32 to index
    %c0_43 = arith.constant 0 : index
    %102 = vector.load %arg10[%101, %c0_43] : memref<64x256xf32, #tpu.memory_space<vmem>>, vector<8x256xf32>
    %103 = tpu.concatenate %100, %102 in 0 : vector<8x256xf32>, vector<8x256xf32> -> vector<16x256xf32>
    %cst_44 = arith.constant dense<0.000000e+00> : vector<16x256xf32>
    %104 = tpu.matmul %90, %15, %cst_44 {dimension_numbers = #tpu.dot_dimension_numbers<[1], [0], [0], [1], [0, 0, 1, 1], [], []>} : vector<16x32xf32>, vector<32x256xf32>, vector<16x256xf32> -> vector<16x256xf32>
    %105 = arith.addf %103, %104 : vector<16x256xf32>
    %106 = math.tanh %105 : vector<16x256xf32>
    %107 = arith.negf %105 : vector<16x256xf32>
    %108 = math.exp %107 : vector<16x256xf32>
    %cst_45 = arith.constant 1.000000e+00 : f32
    %109 = vector.broadcast %cst_45 : f32 to vector<16x256xf32>
    %110 = arith.addf %109, %108 : vector<16x256xf32>
    %111 = arith.divf %109, %110 : vector<16x256xf32>
    %112 = arith.select %42, %106, %111 : vector<16x256xi1>, vector<16x256xf32>
    %113 = vector.extract_strided_slice %112 {offsets = [0, 0], sizes = [16, 128], strides = [1, 1]} : vector<16x256xf32> to vector<16x128xf32>
    %114 = vector.extract_strided_slice %112 {offsets = [0, 128], sizes = [16, 128], strides = [1, 1]} : vector<16x256xf32> to vector<16x128xf32>
    %115 = vector.shape_cast %20 : vector<16x1xi1> to vector<16x1xi1>
    %116 = vector.broadcast %115 : vector<16x1xi1> to vector<16x128xi1>
    %117 = arith.select %116, %113, %114 : vector<16x128xi1>, vector<16x128xf32>
    %118 = vector.extract_strided_slice %117 {offsets = [0, 0], sizes = [16, 32], strides = [1, 1]} : vector<16x128xf32> to vector<16x32xf32>
    %119 = vector.extract_strided_slice %117 {offsets = [0, 32], sizes = [16, 32], strides = [1, 1]} : vector<16x128xf32> to vector<16x32xf32>
    %120 = vector.extract_strided_slice %117 {offsets = [0, 64], sizes = [16, 32], strides = [1, 1]} : vector<16x128xf32> to vector<16x32xf32>
    %121 = vector.extract_strided_slice %117 {offsets = [0, 96], sizes = [16, 32], strides = [1, 1]} : vector<16x128xf32> to vector<16x32xf32>
    %122 = arith.mulf %119, %93 : vector<16x32xf32>
    %123 = arith.mulf %118, %120 : vector<16x32xf32>
    %124 = arith.addf %122, %123 : vector<16x32xf32>
    %125 = math.tanh %124 : vector<16x32xf32>
    %126 = arith.mulf %121, %125 : vector<16x32xf32>
    %c8_i32_46 = arith.constant 8 : i32
    %127 = arith.muli %arg1, %c8_i32_46 : i32
    %128 = arith.addi %127, %c1_i32_38 : i32
    %c7_i32_47 = arith.constant 7 : i32
    %129 = arith.subi %c7_i32_47, %128 : i32
    %130 = vector.broadcast %128 : i32 to vector<16x1xi32>
    %131 = vector.broadcast %129 : i32 to vector<16x1xi32>
    %132 = arith.select %20, %130, %131 : vector<16x1xi1>, vector<16x1xi32>
    %133 = arith.cmpi slt, %132, %17 : vector<16x1xi32>
    %134 = vector.shape_cast %133 : vector<16x1xi1> to vector<16x1xi1>
    %135 = vector.broadcast %134 : vector<16x1xi1> to vector<16x32xi1>
    %136 = arith.select %135, %126, %90 : vector<16x32xi1>, vector<16x32xf32>
    %137 = vector.shape_cast %133 : vector<16x1xi1> to vector<16x1xi1>
    %138 = vector.broadcast %137 : vector<16x1xi1> to vector<16x32xi1>
    %139 = arith.select %138, %124, %93 : vector<16x32xi1>, vector<16x32xf32>
    %c2_i32 = arith.constant 2 : i32
    %c8_i32_48 = arith.constant 8 : i32
    %140 = arith.muli %c2_i32, %c8_i32_48 : i32
    %141 = tpu.assume_multiple %140, 8 : i32
    %c7_i32_49 = arith.constant 7 : i32
    %142 = arith.subi %c7_i32_49, %c2_i32 : i32
    %c8_i32_50 = arith.constant 8 : i32
    %143 = arith.muli %142, %c8_i32_50 : i32
    %144 = tpu.assume_multiple %143, 8 : i32
    %145 = arith.index_cast %141 : i32 to index
    %c0_51 = arith.constant 0 : index
    %146 = vector.load %arg9[%145, %c0_51] : memref<64x256xf32, #tpu.memory_space<vmem>>, vector<8x256xf32>
    %147 = arith.index_cast %144 : i32 to index
    %c0_52 = arith.constant 0 : index
    %148 = vector.load %arg10[%147, %c0_52] : memref<64x256xf32, #tpu.memory_space<vmem>>, vector<8x256xf32>
    %149 = tpu.concatenate %146, %148 in 0 : vector<8x256xf32>, vector<8x256xf32> -> vector<16x256xf32>
    %cst_53 = arith.constant dense<0.000000e+00> : vector<16x256xf32>
    %150 = tpu.matmul %136, %15, %cst_53 {dimension_numbers = #tpu.dot_dimension_numbers<[1], [0], [0], [1], [0, 0, 1, 1], [], []>} : vector<16x32xf32>, vector<32x256xf32>, vector<16x256xf32> -> vector<16x256xf32>
    %151 = arith.addf %149, %150 : vector<16x256xf32>
    %152 = math.tanh %151 : vector<16x256xf32>
    %153 = arith.negf %151 : vector<16x256xf32>
    %154 = math.exp %153 : vector<16x256xf32>
    %cst_54 = arith.constant 1.000000e+00 : f32
    %155 = vector.broadcast %cst_54 : f32 to vector<16x256xf32>
    %156 = arith.addf %155, %154 : vector<16x256xf32>
    %157 = arith.divf %155, %156 : vector<16x256xf32>
    %158 = arith.select %42, %152, %157 : vector<16x256xi1>, vector<16x256xf32>
    %159 = vector.extract_strided_slice %158 {offsets = [0, 0], sizes = [16, 128], strides = [1, 1]} : vector<16x256xf32> to vector<16x128xf32>
    %160 = vector.extract_strided_slice %158 {offsets = [0, 128], sizes = [16, 128], strides = [1, 1]} : vector<16x256xf32> to vector<16x128xf32>
    %161 = vector.shape_cast %20 : vector<16x1xi1> to vector<16x1xi1>
    %162 = vector.broadcast %161 : vector<16x1xi1> to vector<16x128xi1>
    %163 = arith.select %162, %159, %160 : vector<16x128xi1>, vector<16x128xf32>
    %164 = vector.extract_strided_slice %163 {offsets = [0, 0], sizes = [16, 32], strides = [1, 1]} : vector<16x128xf32> to vector<16x32xf32>
    %165 = vector.extract_strided_slice %163 {offsets = [0, 32], sizes = [16, 32], strides = [1, 1]} : vector<16x128xf32> to vector<16x32xf32>
    %166 = vector.extract_strided_slice %163 {offsets = [0, 64], sizes = [16, 32], strides = [1, 1]} : vector<16x128xf32> to vector<16x32xf32>
    %167 = vector.extract_strided_slice %163 {offsets = [0, 96], sizes = [16, 32], strides = [1, 1]} : vector<16x128xf32> to vector<16x32xf32>
    %168 = arith.mulf %165, %139 : vector<16x32xf32>
    %169 = arith.mulf %164, %166 : vector<16x32xf32>
    %170 = arith.addf %168, %169 : vector<16x32xf32>
    %171 = math.tanh %170 : vector<16x32xf32>
    %172 = arith.mulf %167, %171 : vector<16x32xf32>
    %c8_i32_55 = arith.constant 8 : i32
    %173 = arith.muli %arg1, %c8_i32_55 : i32
    %174 = arith.addi %173, %c2_i32 : i32
    %c7_i32_56 = arith.constant 7 : i32
    %175 = arith.subi %c7_i32_56, %174 : i32
    %176 = vector.broadcast %174 : i32 to vector<16x1xi32>
    %177 = vector.broadcast %175 : i32 to vector<16x1xi32>
    %178 = arith.select %20, %176, %177 : vector<16x1xi1>, vector<16x1xi32>
    %179 = arith.cmpi slt, %178, %17 : vector<16x1xi32>
    %180 = vector.shape_cast %179 : vector<16x1xi1> to vector<16x1xi1>
    %181 = vector.broadcast %180 : vector<16x1xi1> to vector<16x32xi1>
    %182 = arith.select %181, %172, %136 : vector<16x32xi1>, vector<16x32xf32>
    %183 = vector.shape_cast %179 : vector<16x1xi1> to vector<16x1xi1>
    %184 = vector.broadcast %183 : vector<16x1xi1> to vector<16x32xi1>
    %185 = arith.select %184, %170, %139 : vector<16x32xi1>, vector<16x32xf32>
    %c3_i32 = arith.constant 3 : i32
    %c8_i32_57 = arith.constant 8 : i32
    %186 = arith.muli %c3_i32, %c8_i32_57 : i32
    %187 = tpu.assume_multiple %186, 8 : i32
    %c7_i32_58 = arith.constant 7 : i32
    %188 = arith.subi %c7_i32_58, %c3_i32 : i32
    %c8_i32_59 = arith.constant 8 : i32
    %189 = arith.muli %188, %c8_i32_59 : i32
    %190 = tpu.assume_multiple %189, 8 : i32
    %191 = arith.index_cast %187 : i32 to index
    %c0_60 = arith.constant 0 : index
    %192 = vector.load %arg9[%191, %c0_60] : memref<64x256xf32, #tpu.memory_space<vmem>>, vector<8x256xf32>
    %193 = arith.index_cast %190 : i32 to index
    %c0_61 = arith.constant 0 : index
    %194 = vector.load %arg10[%193, %c0_61] : memref<64x256xf32, #tpu.memory_space<vmem>>, vector<8x256xf32>
    %195 = tpu.concatenate %192, %194 in 0 : vector<8x256xf32>, vector<8x256xf32> -> vector<16x256xf32>
    %cst_62 = arith.constant dense<0.000000e+00> : vector<16x256xf32>
    %196 = tpu.matmul %182, %15, %cst_62 {dimension_numbers = #tpu.dot_dimension_numbers<[1], [0], [0], [1], [0, 0, 1, 1], [], []>} : vector<16x32xf32>, vector<32x256xf32>, vector<16x256xf32> -> vector<16x256xf32>
    %197 = arith.addf %195, %196 : vector<16x256xf32>
    %198 = math.tanh %197 : vector<16x256xf32>
    %199 = arith.negf %197 : vector<16x256xf32>
    %200 = math.exp %199 : vector<16x256xf32>
    %cst_63 = arith.constant 1.000000e+00 : f32
    %201 = vector.broadcast %cst_63 : f32 to vector<16x256xf32>
    %202 = arith.addf %201, %200 : vector<16x256xf32>
    %203 = arith.divf %201, %202 : vector<16x256xf32>
    %204 = arith.select %42, %198, %203 : vector<16x256xi1>, vector<16x256xf32>
    %205 = vector.extract_strided_slice %204 {offsets = [0, 0], sizes = [16, 128], strides = [1, 1]} : vector<16x256xf32> to vector<16x128xf32>
    %206 = vector.extract_strided_slice %204 {offsets = [0, 128], sizes = [16, 128], strides = [1, 1]} : vector<16x256xf32> to vector<16x128xf32>
    %207 = vector.shape_cast %20 : vector<16x1xi1> to vector<16x1xi1>
    %208 = vector.broadcast %207 : vector<16x1xi1> to vector<16x128xi1>
    %209 = arith.select %208, %205, %206 : vector<16x128xi1>, vector<16x128xf32>
    %210 = vector.extract_strided_slice %209 {offsets = [0, 0], sizes = [16, 32], strides = [1, 1]} : vector<16x128xf32> to vector<16x32xf32>
    %211 = vector.extract_strided_slice %209 {offsets = [0, 32], sizes = [16, 32], strides = [1, 1]} : vector<16x128xf32> to vector<16x32xf32>
    %212 = vector.extract_strided_slice %209 {offsets = [0, 64], sizes = [16, 32], strides = [1, 1]} : vector<16x128xf32> to vector<16x32xf32>
    %213 = vector.extract_strided_slice %209 {offsets = [0, 96], sizes = [16, 32], strides = [1, 1]} : vector<16x128xf32> to vector<16x32xf32>
    %214 = arith.mulf %211, %185 : vector<16x32xf32>
    %215 = arith.mulf %210, %212 : vector<16x32xf32>
    %216 = arith.addf %214, %215 : vector<16x32xf32>
    %217 = math.tanh %216 : vector<16x32xf32>
    %218 = arith.mulf %213, %217 : vector<16x32xf32>
    %c8_i32_64 = arith.constant 8 : i32
    %219 = arith.muli %arg1, %c8_i32_64 : i32
    %220 = arith.addi %219, %c3_i32 : i32
    %c7_i32_65 = arith.constant 7 : i32
    %221 = arith.subi %c7_i32_65, %220 : i32
    %222 = vector.broadcast %220 : i32 to vector<16x1xi32>
    %223 = vector.broadcast %221 : i32 to vector<16x1xi32>
    %224 = arith.select %20, %222, %223 : vector<16x1xi1>, vector<16x1xi32>
    %225 = arith.cmpi slt, %224, %17 : vector<16x1xi32>
    %226 = vector.shape_cast %225 : vector<16x1xi1> to vector<16x1xi1>
    %227 = vector.broadcast %226 : vector<16x1xi1> to vector<16x32xi1>
    %228 = arith.select %227, %218, %182 : vector<16x32xi1>, vector<16x32xf32>
    %229 = vector.shape_cast %225 : vector<16x1xi1> to vector<16x1xi1>
    %230 = vector.broadcast %229 : vector<16x1xi1> to vector<16x32xi1>
    %231 = arith.select %230, %216, %185 : vector<16x32xi1>, vector<16x32xf32>
    %c4_i32 = arith.constant 4 : i32
    %c8_i32_66 = arith.constant 8 : i32
    %232 = arith.muli %c4_i32, %c8_i32_66 : i32
    %233 = tpu.assume_multiple %232, 8 : i32
    %c7_i32_67 = arith.constant 7 : i32
    %234 = arith.subi %c7_i32_67, %c4_i32 : i32
    %c8_i32_68 = arith.constant 8 : i32
    %235 = arith.muli %234, %c8_i32_68 : i32
    %236 = tpu.assume_multiple %235, 8 : i32
    %237 = arith.index_cast %233 : i32 to index
    %c0_69 = arith.constant 0 : index
    %238 = vector.load %arg9[%237, %c0_69] : memref<64x256xf32, #tpu.memory_space<vmem>>, vector<8x256xf32>
    %239 = arith.index_cast %236 : i32 to index
    %c0_70 = arith.constant 0 : index
    %240 = vector.load %arg10[%239, %c0_70] : memref<64x256xf32, #tpu.memory_space<vmem>>, vector<8x256xf32>
    %241 = tpu.concatenate %238, %240 in 0 : vector<8x256xf32>, vector<8x256xf32> -> vector<16x256xf32>
    %cst_71 = arith.constant dense<0.000000e+00> : vector<16x256xf32>
    %242 = tpu.matmul %228, %15, %cst_71 {dimension_numbers = #tpu.dot_dimension_numbers<[1], [0], [0], [1], [0, 0, 1, 1], [], []>} : vector<16x32xf32>, vector<32x256xf32>, vector<16x256xf32> -> vector<16x256xf32>
    %243 = arith.addf %241, %242 : vector<16x256xf32>
    %244 = math.tanh %243 : vector<16x256xf32>
    %245 = arith.negf %243 : vector<16x256xf32>
    %246 = math.exp %245 : vector<16x256xf32>
    %cst_72 = arith.constant 1.000000e+00 : f32
    %247 = vector.broadcast %cst_72 : f32 to vector<16x256xf32>
    %248 = arith.addf %247, %246 : vector<16x256xf32>
    %249 = arith.divf %247, %248 : vector<16x256xf32>
    %250 = arith.select %42, %244, %249 : vector<16x256xi1>, vector<16x256xf32>
    %251 = vector.extract_strided_slice %250 {offsets = [0, 0], sizes = [16, 128], strides = [1, 1]} : vector<16x256xf32> to vector<16x128xf32>
    %252 = vector.extract_strided_slice %250 {offsets = [0, 128], sizes = [16, 128], strides = [1, 1]} : vector<16x256xf32> to vector<16x128xf32>
    %253 = vector.shape_cast %20 : vector<16x1xi1> to vector<16x1xi1>
    %254 = vector.broadcast %253 : vector<16x1xi1> to vector<16x128xi1>
    %255 = arith.select %254, %251, %252 : vector<16x128xi1>, vector<16x128xf32>
    %256 = vector.extract_strided_slice %255 {offsets = [0, 0], sizes = [16, 32], strides = [1, 1]} : vector<16x128xf32> to vector<16x32xf32>
    %257 = vector.extract_strided_slice %255 {offsets = [0, 32], sizes = [16, 32], strides = [1, 1]} : vector<16x128xf32> to vector<16x32xf32>
    %258 = vector.extract_strided_slice %255 {offsets = [0, 64], sizes = [16, 32], strides = [1, 1]} : vector<16x128xf32> to vector<16x32xf32>
    %259 = vector.extract_strided_slice %255 {offsets = [0, 96], sizes = [16, 32], strides = [1, 1]} : vector<16x128xf32> to vector<16x32xf32>
    %260 = arith.mulf %257, %231 : vector<16x32xf32>
    %261 = arith.mulf %256, %258 : vector<16x32xf32>
    %262 = arith.addf %260, %261 : vector<16x32xf32>
    %263 = math.tanh %262 : vector<16x32xf32>
    %264 = arith.mulf %259, %263 : vector<16x32xf32>
    %c8_i32_73 = arith.constant 8 : i32
    %265 = arith.muli %arg1, %c8_i32_73 : i32
    %266 = arith.addi %265, %c4_i32 : i32
    %c7_i32_74 = arith.constant 7 : i32
    %267 = arith.subi %c7_i32_74, %266 : i32
    %268 = vector.broadcast %266 : i32 to vector<16x1xi32>
    %269 = vector.broadcast %267 : i32 to vector<16x1xi32>
    %270 = arith.select %20, %268, %269 : vector<16x1xi1>, vector<16x1xi32>
    %271 = arith.cmpi slt, %270, %17 : vector<16x1xi32>
    %272 = vector.shape_cast %271 : vector<16x1xi1> to vector<16x1xi1>
    %273 = vector.broadcast %272 : vector<16x1xi1> to vector<16x32xi1>
    %274 = arith.select %273, %264, %228 : vector<16x32xi1>, vector<16x32xf32>
    %275 = vector.shape_cast %271 : vector<16x1xi1> to vector<16x1xi1>
    %276 = vector.broadcast %275 : vector<16x1xi1> to vector<16x32xi1>
    %277 = arith.select %276, %262, %231 : vector<16x32xi1>, vector<16x32xf32>
    %c5_i32 = arith.constant 5 : i32
    %c8_i32_75 = arith.constant 8 : i32
    %278 = arith.muli %c5_i32, %c8_i32_75 : i32
    %279 = tpu.assume_multiple %278, 8 : i32
    %c7_i32_76 = arith.constant 7 : i32
    %280 = arith.subi %c7_i32_76, %c5_i32 : i32
    %c8_i32_77 = arith.constant 8 : i32
    %281 = arith.muli %280, %c8_i32_77 : i32
    %282 = tpu.assume_multiple %281, 8 : i32
    %283 = arith.index_cast %279 : i32 to index
    %c0_78 = arith.constant 0 : index
    %284 = vector.load %arg9[%283, %c0_78] : memref<64x256xf32, #tpu.memory_space<vmem>>, vector<8x256xf32>
    %285 = arith.index_cast %282 : i32 to index
    %c0_79 = arith.constant 0 : index
    %286 = vector.load %arg10[%285, %c0_79] : memref<64x256xf32, #tpu.memory_space<vmem>>, vector<8x256xf32>
    %287 = tpu.concatenate %284, %286 in 0 : vector<8x256xf32>, vector<8x256xf32> -> vector<16x256xf32>
    %cst_80 = arith.constant dense<0.000000e+00> : vector<16x256xf32>
    %288 = tpu.matmul %274, %15, %cst_80 {dimension_numbers = #tpu.dot_dimension_numbers<[1], [0], [0], [1], [0, 0, 1, 1], [], []>} : vector<16x32xf32>, vector<32x256xf32>, vector<16x256xf32> -> vector<16x256xf32>
    %289 = arith.addf %287, %288 : vector<16x256xf32>
    %290 = math.tanh %289 : vector<16x256xf32>
    %291 = arith.negf %289 : vector<16x256xf32>
    %292 = math.exp %291 : vector<16x256xf32>
    %cst_81 = arith.constant 1.000000e+00 : f32
    %293 = vector.broadcast %cst_81 : f32 to vector<16x256xf32>
    %294 = arith.addf %293, %292 : vector<16x256xf32>
    %295 = arith.divf %293, %294 : vector<16x256xf32>
    %296 = arith.select %42, %290, %295 : vector<16x256xi1>, vector<16x256xf32>
    %297 = vector.extract_strided_slice %296 {offsets = [0, 0], sizes = [16, 128], strides = [1, 1]} : vector<16x256xf32> to vector<16x128xf32>
    %298 = vector.extract_strided_slice %296 {offsets = [0, 128], sizes = [16, 128], strides = [1, 1]} : vector<16x256xf32> to vector<16x128xf32>
    %299 = vector.shape_cast %20 : vector<16x1xi1> to vector<16x1xi1>
    %300 = vector.broadcast %299 : vector<16x1xi1> to vector<16x128xi1>
    %301 = arith.select %300, %297, %298 : vector<16x128xi1>, vector<16x128xf32>
    %302 = vector.extract_strided_slice %301 {offsets = [0, 0], sizes = [16, 32], strides = [1, 1]} : vector<16x128xf32> to vector<16x32xf32>
    %303 = vector.extract_strided_slice %301 {offsets = [0, 32], sizes = [16, 32], strides = [1, 1]} : vector<16x128xf32> to vector<16x32xf32>
    %304 = vector.extract_strided_slice %301 {offsets = [0, 64], sizes = [16, 32], strides = [1, 1]} : vector<16x128xf32> to vector<16x32xf32>
    %305 = vector.extract_strided_slice %301 {offsets = [0, 96], sizes = [16, 32], strides = [1, 1]} : vector<16x128xf32> to vector<16x32xf32>
    %306 = arith.mulf %303, %277 : vector<16x32xf32>
    %307 = arith.mulf %302, %304 : vector<16x32xf32>
    %308 = arith.addf %306, %307 : vector<16x32xf32>
    %309 = math.tanh %308 : vector<16x32xf32>
    %310 = arith.mulf %305, %309 : vector<16x32xf32>
    %c8_i32_82 = arith.constant 8 : i32
    %311 = arith.muli %arg1, %c8_i32_82 : i32
    %312 = arith.addi %311, %c5_i32 : i32
    %c7_i32_83 = arith.constant 7 : i32
    %313 = arith.subi %c7_i32_83, %312 : i32
    %314 = vector.broadcast %312 : i32 to vector<16x1xi32>
    %315 = vector.broadcast %313 : i32 to vector<16x1xi32>
    %316 = arith.select %20, %314, %315 : vector<16x1xi1>, vector<16x1xi32>
    %317 = arith.cmpi slt, %316, %17 : vector<16x1xi32>
    %318 = vector.shape_cast %317 : vector<16x1xi1> to vector<16x1xi1>
    %319 = vector.broadcast %318 : vector<16x1xi1> to vector<16x32xi1>
    %320 = arith.select %319, %310, %274 : vector<16x32xi1>, vector<16x32xf32>
    %321 = vector.shape_cast %317 : vector<16x1xi1> to vector<16x1xi1>
    %322 = vector.broadcast %321 : vector<16x1xi1> to vector<16x32xi1>
    %323 = arith.select %322, %308, %277 : vector<16x32xi1>, vector<16x32xf32>
    %c6_i32 = arith.constant 6 : i32
    %c8_i32_84 = arith.constant 8 : i32
    %324 = arith.muli %c6_i32, %c8_i32_84 : i32
    %325 = tpu.assume_multiple %324, 8 : i32
    %c7_i32_85 = arith.constant 7 : i32
    %326 = arith.subi %c7_i32_85, %c6_i32 : i32
    %c8_i32_86 = arith.constant 8 : i32
    %327 = arith.muli %326, %c8_i32_86 : i32
    %328 = tpu.assume_multiple %327, 8 : i32
    %329 = arith.index_cast %325 : i32 to index
    %c0_87 = arith.constant 0 : index
    %330 = vector.load %arg9[%329, %c0_87] : memref<64x256xf32, #tpu.memory_space<vmem>>, vector<8x256xf32>
    %331 = arith.index_cast %328 : i32 to index
    %c0_88 = arith.constant 0 : index
    %332 = vector.load %arg10[%331, %c0_88] : memref<64x256xf32, #tpu.memory_space<vmem>>, vector<8x256xf32>
    %333 = tpu.concatenate %330, %332 in 0 : vector<8x256xf32>, vector<8x256xf32> -> vector<16x256xf32>
    %cst_89 = arith.constant dense<0.000000e+00> : vector<16x256xf32>
    %334 = tpu.matmul %320, %15, %cst_89 {dimension_numbers = #tpu.dot_dimension_numbers<[1], [0], [0], [1], [0, 0, 1, 1], [], []>} : vector<16x32xf32>, vector<32x256xf32>, vector<16x256xf32> -> vector<16x256xf32>
    %335 = arith.addf %333, %334 : vector<16x256xf32>
    %336 = math.tanh %335 : vector<16x256xf32>
    %337 = arith.negf %335 : vector<16x256xf32>
    %338 = math.exp %337 : vector<16x256xf32>
    %cst_90 = arith.constant 1.000000e+00 : f32
    %339 = vector.broadcast %cst_90 : f32 to vector<16x256xf32>
    %340 = arith.addf %339, %338 : vector<16x256xf32>
    %341 = arith.divf %339, %340 : vector<16x256xf32>
    %342 = arith.select %42, %336, %341 : vector<16x256xi1>, vector<16x256xf32>
    %343 = vector.extract_strided_slice %342 {offsets = [0, 0], sizes = [16, 128], strides = [1, 1]} : vector<16x256xf32> to vector<16x128xf32>
    %344 = vector.extract_strided_slice %342 {offsets = [0, 128], sizes = [16, 128], strides = [1, 1]} : vector<16x256xf32> to vector<16x128xf32>
    %345 = vector.shape_cast %20 : vector<16x1xi1> to vector<16x1xi1>
    %346 = vector.broadcast %345 : vector<16x1xi1> to vector<16x128xi1>
    %347 = arith.select %346, %343, %344 : vector<16x128xi1>, vector<16x128xf32>
    %348 = vector.extract_strided_slice %347 {offsets = [0, 0], sizes = [16, 32], strides = [1, 1]} : vector<16x128xf32> to vector<16x32xf32>
    %349 = vector.extract_strided_slice %347 {offsets = [0, 32], sizes = [16, 32], strides = [1, 1]} : vector<16x128xf32> to vector<16x32xf32>
    %350 = vector.extract_strided_slice %347 {offsets = [0, 64], sizes = [16, 32], strides = [1, 1]} : vector<16x128xf32> to vector<16x32xf32>
    %351 = vector.extract_strided_slice %347 {offsets = [0, 96], sizes = [16, 32], strides = [1, 1]} : vector<16x128xf32> to vector<16x32xf32>
    %352 = arith.mulf %349, %323 : vector<16x32xf32>
    %353 = arith.mulf %348, %350 : vector<16x32xf32>
    %354 = arith.addf %352, %353 : vector<16x32xf32>
    %355 = math.tanh %354 : vector<16x32xf32>
    %356 = arith.mulf %351, %355 : vector<16x32xf32>
    %c8_i32_91 = arith.constant 8 : i32
    %357 = arith.muli %arg1, %c8_i32_91 : i32
    %358 = arith.addi %357, %c6_i32 : i32
    %c7_i32_92 = arith.constant 7 : i32
    %359 = arith.subi %c7_i32_92, %358 : i32
    %360 = vector.broadcast %358 : i32 to vector<16x1xi32>
    %361 = vector.broadcast %359 : i32 to vector<16x1xi32>
    %362 = arith.select %20, %360, %361 : vector<16x1xi1>, vector<16x1xi32>
    %363 = arith.cmpi slt, %362, %17 : vector<16x1xi32>
    %364 = vector.shape_cast %363 : vector<16x1xi1> to vector<16x1xi1>
    %365 = vector.broadcast %364 : vector<16x1xi1> to vector<16x32xi1>
    %366 = arith.select %365, %356, %320 : vector<16x32xi1>, vector<16x32xf32>
    %367 = vector.shape_cast %363 : vector<16x1xi1> to vector<16x1xi1>
    %368 = vector.broadcast %367 : vector<16x1xi1> to vector<16x32xi1>
    %369 = arith.select %368, %354, %323 : vector<16x32xi1>, vector<16x32xf32>
    %c7_i32_93 = arith.constant 7 : i32
    %c8_i32_94 = arith.constant 8 : i32
    %370 = arith.muli %c7_i32_93, %c8_i32_94 : i32
    %371 = tpu.assume_multiple %370, 8 : i32
    %c7_i32_95 = arith.constant 7 : i32
    %372 = arith.subi %c7_i32_95, %c7_i32_93 : i32
    %c8_i32_96 = arith.constant 8 : i32
    %373 = arith.muli %372, %c8_i32_96 : i32
    %374 = tpu.assume_multiple %373, 8 : i32
    %375 = arith.index_cast %371 : i32 to index
    %c0_97 = arith.constant 0 : index
    %376 = vector.load %arg9[%375, %c0_97] : memref<64x256xf32, #tpu.memory_space<vmem>>, vector<8x256xf32>
    %377 = arith.index_cast %374 : i32 to index
    %c0_98 = arith.constant 0 : index
    %378 = vector.load %arg10[%377, %c0_98] : memref<64x256xf32, #tpu.memory_space<vmem>>, vector<8x256xf32>
    %379 = tpu.concatenate %376, %378 in 0 : vector<8x256xf32>, vector<8x256xf32> -> vector<16x256xf32>
    %cst_99 = arith.constant dense<0.000000e+00> : vector<16x256xf32>
    %380 = tpu.matmul %366, %15, %cst_99 {dimension_numbers = #tpu.dot_dimension_numbers<[1], [0], [0], [1], [0, 0, 1, 1], [], []>} : vector<16x32xf32>, vector<32x256xf32>, vector<16x256xf32> -> vector<16x256xf32>
    %381 = arith.addf %379, %380 : vector<16x256xf32>
    %382 = math.tanh %381 : vector<16x256xf32>
    %383 = arith.negf %381 : vector<16x256xf32>
    %384 = math.exp %383 : vector<16x256xf32>
    %cst_100 = arith.constant 1.000000e+00 : f32
    %385 = vector.broadcast %cst_100 : f32 to vector<16x256xf32>
    %386 = arith.addf %385, %384 : vector<16x256xf32>
    %387 = arith.divf %385, %386 : vector<16x256xf32>
    %388 = arith.select %42, %382, %387 : vector<16x256xi1>, vector<16x256xf32>
    %389 = vector.extract_strided_slice %388 {offsets = [0, 0], sizes = [16, 128], strides = [1, 1]} : vector<16x256xf32> to vector<16x128xf32>
    %390 = vector.extract_strided_slice %388 {offsets = [0, 128], sizes = [16, 128], strides = [1, 1]} : vector<16x256xf32> to vector<16x128xf32>
    %391 = vector.shape_cast %20 : vector<16x1xi1> to vector<16x1xi1>
    %392 = vector.broadcast %391 : vector<16x1xi1> to vector<16x128xi1>
    %393 = arith.select %392, %389, %390 : vector<16x128xi1>, vector<16x128xf32>
    %394 = vector.extract_strided_slice %393 {offsets = [0, 0], sizes = [16, 32], strides = [1, 1]} : vector<16x128xf32> to vector<16x32xf32>
    %395 = vector.extract_strided_slice %393 {offsets = [0, 32], sizes = [16, 32], strides = [1, 1]} : vector<16x128xf32> to vector<16x32xf32>
    %396 = vector.extract_strided_slice %393 {offsets = [0, 64], sizes = [16, 32], strides = [1, 1]} : vector<16x128xf32> to vector<16x32xf32>
    %397 = vector.extract_strided_slice %393 {offsets = [0, 96], sizes = [16, 32], strides = [1, 1]} : vector<16x128xf32> to vector<16x32xf32>
    %398 = arith.mulf %395, %369 : vector<16x32xf32>
    %399 = arith.mulf %394, %396 : vector<16x32xf32>
    %400 = arith.addf %398, %399 : vector<16x32xf32>
    %401 = math.tanh %400 : vector<16x32xf32>
    %402 = arith.mulf %397, %401 : vector<16x32xf32>
    %c8_i32_101 = arith.constant 8 : i32
    %403 = arith.muli %arg1, %c8_i32_101 : i32
    %404 = arith.addi %403, %c7_i32_93 : i32
    %c7_i32_102 = arith.constant 7 : i32
    %405 = arith.subi %c7_i32_102, %404 : i32
    %406 = vector.broadcast %404 : i32 to vector<16x1xi32>
    %407 = vector.broadcast %405 : i32 to vector<16x1xi32>
    %408 = arith.select %20, %406, %407 : vector<16x1xi1>, vector<16x1xi32>
    %409 = arith.cmpi slt, %408, %17 : vector<16x1xi32>
    %410 = vector.shape_cast %409 : vector<16x1xi1> to vector<16x1xi1>
    %411 = vector.broadcast %410 : vector<16x1xi1> to vector<16x32xi1>
    %412 = arith.select %411, %402, %366 : vector<16x32xi1>, vector<16x32xf32>
    %413 = vector.shape_cast %409 : vector<16x1xi1> to vector<16x1xi1>
    %414 = vector.broadcast %413 : vector<16x1xi1> to vector<16x32xi1>
    %415 = arith.select %414, %400, %369 : vector<16x32xi1>, vector<16x32xf32>
    %c8_i32_103 = arith.constant 8 : i32
    %c0_104 = arith.constant 0 : index
    %c0_105 = arith.constant 0 : index
    %416 = vector.load %arg11[%c0_104, %c0_105] : memref<16x32xf32, #tpu.memory_space<vmem>>, vector<16x32xf32>
    tpu.vector_store %arg11[%c0_104, %c0_105], %412 {strides = array<i32>} : memref<16x32xf32, #tpu.memory_space<vmem>>, vector<16x32xf32>,
    %c0_106 = arith.constant 0 : index
    %c0_107 = arith.constant 0 : index
    %417 = vector.load %arg12[%c0_106, %c0_107] : memref<16x32xf32, #tpu.memory_space<vmem>>, vector<16x32xf32>
    tpu.vector_store %arg12[%c0_106, %c0_107], %415 {strides = array<i32>} : memref<16x32xf32, #tpu.memory_space<vmem>>, vector<16x32xf32>,
    %c0_i32_108 = arith.constant 0 : i32
    %418 = arith.cmpi eq, %arg1, %c0_i32_108 : i32
    %419 = arith.extui %418 : i1 to i32
    %c0_i32_109 = arith.constant 0 : i32
    %420 = arith.cmpi ne, %419, %c0_i32_109 : i32
    scf.if %420 {
      %421 = vector.extract_strided_slice %412 {offsets = [0, 0], sizes = [8, 32], strides = [1, 1]} : vector<16x32xf32> to vector<8x32xf32>
      %422 = vector.extract_strided_slice %412 {offsets = [8, 0], sizes = [8, 32], strides = [1, 1]} : vector<16x32xf32> to vector<8x32xf32>
      %423 = tpu.concatenate %421, %422 in 1 : vector<8x32xf32>, vector<8x32xf32> -> vector<8x64xf32>
      %c0_110 = arith.constant 0 : index
      %c0_111 = arith.constant 0 : index
      %424 = vector.load %arg8[%c0_110, %c0_111] : memref<8x64xf32, #tpu.memory_space<vmem>>, vector<8x64xf32>
      tpu.vector_store %arg8[%c0_110, %c0_111], %423 {strides = array<i32>} : memref<8x64xf32, #tpu.memory_space<vmem>>, vector<8x64xf32>,
    } else {
    }
    return
  }
  func.func @transform_0(%arg0: i32, %arg1: i32) -> (i32, i32) {
    %c0_i32 = arith.constant 0 : i32
    %c0_i32_0 = arith.constant 0 : i32
    return %arg0, %c0_i32 : i32, i32
  }
  func.func @transform_1(%arg0: i32, %arg1: i32) -> (i32, i32, i32) {
    %c0_i32 = arith.constant 0 : i32
    %c0_i32_0 = arith.constant 0 : i32
    return %arg0, %arg1, %c0_i32 : i32, i32, i32
  }
  func.func @transform_2(%arg0: i32, %arg1: i32) -> (i32, i32, i32) {
    %c0_i32 = arith.constant 0 : i32
    %0 = arith.subi %c0_i32, %arg1 : i32
    %c0_i32_0 = arith.constant 0 : i32
    %c0_i32_1 = arith.constant 0 : i32
    return %arg0, %0, %c0_i32_0 : i32, i32, i32
  }
  func.func @transform_3(%arg0: i32, %arg1: i32) -> (i32, i32) {
    %c0_i32 = arith.constant 0 : i32
    %c0_i32_0 = arith.constant 0 : i32
    %c0_i32_1 = arith.constant 0 : i32
    return %c0_i32, %c0_i32_0 : i32, i32
  }
  func.func @transform_4(%arg0: i32, %arg1: i32) -> (i32, i32) {
    %c0_i32 = arith.constant 0 : i32
    %c0_i32_0 = arith.constant 0 : i32
    %c0_i32_1 = arith.constant 0 : i32
    return %c0_i32, %c0_i32_0 : i32, i32
  }
  func.func @transform_5(%arg0: i32, %arg1: i32) -> (i32, i32) {
    %c0_i32 = arith.constant 0 : i32
    %c0_i32_0 = arith.constant 0 : i32
    %c0_i32_1 = arith.constant 0 : i32
    return %c0_i32, %c0_i32_0 : i32, i32
  }
  func.func @transform_6(%arg0: i32, %arg1: i32) -> (i32, i32) {
    %c0_i32 = arith.constant 0 : i32
    %c0_i32_0 = arith.constant 0 : i32
    return %arg0, %c0_i32 : i32, i32
  }
}

</mosaic_0001>

<llo_original>
// kernel: tpu_custom_call.1
$region0: #{tpu_custom_call.1}
  #allocation0 [shape = 'u32[]', space=smem, size = 0x4, offset = 0x4, fixed_abs, tag = 'smem constant byte address 0x4 - core index']
  #allocation1 [shape = 'u32[144,128]{1,0:T(1,128)}', space=vmem, size = 0x12000, scoped, tag = 'internal scratch']
  #allocation2 [shape = 'f32[64,256]{1,0:T(8,128)}', space=vmem, size = 0x10000, scoped, tag = 'scratch operand']
  #allocation3 [shape = 'f32[64,256]{1,0:T(8,128)}', space=vmem, size = 0x10000, scoped, tag = 'scratch operand']
  #allocation4 [shape = 'f32[16,32]{1,0:T(8,128)}', space=vmem, size = 0x2000, scoped, tag = 'scratch operand']
  #allocation5 [shape = 'f32[16,32]{1,0:T(8,128)}', space=vmem, size = 0x2000, scoped, tag = 'scratch operand']
  %s0 = inlined_call_operand.vmem [shape: s32[8,1], index: 0, kind: input, shape index: {}]
  %s1 = inlined_call_operand.vmem [shape: f32[1,64,16], index: 1, kind: input, shape index: {}]
  %s2 = inlined_call_operand.vmem [shape: f32[1,64,16], index: 2, kind: input, shape index: {}]
  %s3 = inlined_call_operand.vmem [shape: f32[16,256], index: 3, kind: input, shape index: {}]
  %s4 = inlined_call_operand.vmem [shape: f32[32,256], index: 4, kind: input, shape index: {}]
  %s5 = inlined_call_operand.vmem [shape: f32[1,256], index: 5, kind: input, shape index: {}]
  %s6 = inlined_call_operand.hbm [shape: f32[8,64], index: 6, kind: output, shape index: {}]
  %s7 = sld [smem:[#allocation0]]
  $region42: #{tpu_custom_call.1} parent=0
    _
  %s9 = ssub.s32 1, %s7
  %s10 = scalar_select 0, %s9, %s7
  $region1: #{tpu_custom_call.1} parent=0
    #allocation6 [shape = 'u8[4096]{0}', space=vmem, size = 0x1000, scoped, tag = 'output window, operand 0, single buffered']
    #allocation7 [shape = 's32[1]{0}', space=sflag, size = 0x4, scoped, tag = 'scoped memory for tpu_custom_call.1']
    %11 = vsyncpa [#allocation7], 0
    // Predicated region
    $region2: #{tpu_custom_call.1} parent=1 // pred_check
      _
    $region3: #{tpu_custom_call.1} parent=1 // pred_check_branch
      %13 = sbr.rel (0) target = $region5
    $region4: #{tpu_custom_call.1} parent=1 // pred_region
      _
    $region5: #{tpu_custom_call.1} parent=1 // pred_fallthru
      _
    // Predicated region
    $region6: #{tpu_custom_call.1} parent=1 // pred_check
      _
    $region7: #{tpu_custom_call.1} parent=1 // pred_check_branch
      %15 = sbr.rel (0) target = $region9
    $region8: #{tpu_custom_call.1} parent=1 // pred_region
      _
    $region9: #{tpu_custom_call.1} parent=1 // pred_fallthru
      _
    // Predicated region
    $region10: #{tpu_custom_call.1} parent=1 // pred_check
      _
    $region11: #{tpu_custom_call.1} parent=1 // pred_check_branch
      %17 = sbr.rel (0) target = $region13
    $region12: #{tpu_custom_call.1} parent=1 // pred_region
      %s18 = ssub.s32 0, 0
      %s19 = smul.u32 8, %s18
      %p20 = scmp.lt.s32.totalorder %s19, 7
      %s21 = scalar_select %p20, %s19, 7
      %s22 = smul.addr %s21, 8
      %s23 = scalar_lea.vmem %s2, %s22
      %s24 = ssub.s32 0, 0
      %s25 = smul.u32 8, %s24
    $region13: #{tpu_custom_call.1} parent=1 // pred_fallthru
      _
    // Predicated region
    $region14: #{tpu_custom_call.1} parent=1 // pred_check
      _
    $region15: #{tpu_custom_call.1} parent=1 // pred_check_branch
      %27 = sbr.rel (0) target = $region17
    $region16: #{tpu_custom_call.1} parent=1 // pred_region
      _
    $region17: #{tpu_custom_call.1} parent=1 // pred_fallthru
      _
    // Predicated region
    $region18: #{tpu_custom_call.1} parent=1 // pred_check
      _
    $region19: #{tpu_custom_call.1} parent=1 // pred_check_branch
      %29 = sbr.rel (0) target = $region21
    $region20: #{tpu_custom_call.1} parent=1 // pred_region
      _
    $region21: #{tpu_custom_call.1} parent=1 // pred_fallthru
      _
    // Predicated region
    $region22: #{tpu_custom_call.1} parent=1 // pred_check
      _
    $region23: #{tpu_custom_call.1} parent=1 // pred_check_branch
      %31 = sbr.rel (0) target = $region25
    $region24: #{tpu_custom_call.1} parent=1 // pred_region
      _
    $region25: #{tpu_custom_call.1} parent=1 // pred_fallthru
      _
    %s32 = ssub.s32 0, 0
    %s33 = smul.u32 8, %s32
    %p34 = scmp.lt.s32.totalorder %s33, 7
    %s35 = scalar_select %p34, %s33, 7
    %s36 = smul.addr %s35, 8
    %s37 = scalar_lea.vmem %s2, %s36
    %s38 = ssub.s32 0, 0
    %s39 = smul.u32 8, %s38
    %p40 = scmp.lt.s32.totalorder %s39, 7
    %s41 = scalar_select %p40, %s39, 7
    %s42 = smul.addr %s41, 8
    %s43 = scalar_lea.vmem %s2, %s42
    %s44 = ssub.s32 0, 0
    %s45 = smul.u32 8, %s44
    %v46 = vld [vmem:[%s5] sm:$0x3]
    %v47 = vld [vmem:[%s1] sm:$0xff]
    %v48 = vld [vmem:[%s1 + $0x8] sm:$0xff]
    %v49 = vld [vmem:[%s1 + $0x10] sm:$0xff]
    %v50 = vld [vmem:[%s1 + $0x18] sm:$0xff]
    %v51 = vld [vmem:[%s1 + $0x20] sm:$0xff]
    %v52 = vld [vmem:[%s1 + $0x28] sm:$0xff]
    %v53 = vld [vmem:[%s1 + $0x30] sm:$0xff]
    %v54 = vld [vmem:[%s1 + $0x38] sm:$0xff]
    %v55 = vld [vmem:[%s3] sm:$0xff]
    %v56 = vld [vmem:[%s3 + $0x8] sm:$0xff]
    %v57 = vld [vmem:[%s3 + $0x10] sm:$0xff]
    %v58 = vld [vmem:[%s3 + $0x18] sm:$0xff]
    %v60 = vlaneseq
    %v61 = vshrl.u32 %v60, 7
    %v62 = vsub.s32 0, %v61
    %v63 = vrot.slane %v46, %v62
    %v64 = vlaneseq
    %v65 = vshrl.u32 %v64, 7
    %v66 = vsub.s32 1, %v65
    %v67 = vrot.slane %v46, %v66
    %vm70 = vcmask 130048
    %v72 = vsel %vm70, %v47, 0
    %v75 = vsel %vm70, %v48, 0
    %v78 = vsel %vm70, %v49, 0
    %v81 = vsel %vm70, %v50, 0
    %v84 = vsel %vm70, %v51, 0
    %v87 = vsel %vm70, %v52, 0
    %v90 = vsel %vm70, %v53, 0
    %v93 = vsel %vm70, %v54, 0
    %95 = vmatprep.subr.mxu0 %v56
    %96 = vmatpush1.msra.mxu0 %v55
    %97 = vmatprep.subr.mxu0 %v58
    %98 = vmatpush1.msra.mxu0 %v57
    %99 = vmatprep.subr.mxu0 0.0
    %100 = vmatpush1.msra.mxu0 0.0
    %101 = vmatprep.subr.mxu0 0.0
    %102 = vmatpush1.msra.mxu0 0.0
    %103 = vmatprep.subr.mxu0 0.0
    %104 = vmatpush1.msra.mxu0 0.0
    %105 = vmatprep.subr.mxu0 0.0
    %106 = vmatpush1.msra.mxu0 0.0
    %107 = vmatprep.subr.mxu0 0.0
    %108 = vmatpush1.msra.mxu0 0.0
    %109 = vmatprep.subr.mxu0 0.0
    %110 = vmatpush1.msra.mxu0 0.0
    %111 = vmatprep.subr.mxu0 0.0
    %112 = vmatpush1.msra.mxu0 0.0
    %113 = vmatprep.subr.mxu0 0.0
    %114 = vmatpush1.msra.mxu0 0.0
    %115 = vmatprep.subr.mxu0 0.0
    %116 = vmatpush1.msra.mxu0 0.0
    %117 = vmatprep.subr.mxu0 0.0
    %118 = vmatpush1.msra.mxu0 0.0
    %119 = vmatprep.subr.mxu0 0.0
    %120 = vmatpush1.msra.mxu0 0.0
    %121 = vmatprep.subr.mxu0 0.0
    %122 = vmatpush1.msra.mxu0 0.0
    %123 = vmatprep.subr.mxu0 0.0
    %124 = vmatpush1.msra.mxu0 0.0
    %125 = vmatprep.subr.mxu0 0.0
    %126 = vmatpush1.msra.mxu0 0.0
    %127 = vmatprep.subr.mxu0 0.0
    %128 = vmatpush1.msra.mxu0 0.0
    %129 = vmatprep.subr.mxu0 0.0
    %130 = vmatpush1.msra.mxu0 0.0
    %131 = vmatprep.subr.mxu0 0.0
    %132 = vmatpush1.msra.mxu0 0.0
    %133 = vmatprep.subr.mxu0 0.0
    %134 = vmatpush1.msra.mxu0 0.0
    %135 = vmatprep.subr.mxu0 0.0
    %136 = vmatpush1.msra.mxu0 0.0
    %137 = vmatprep.subr.mxu0 0.0
    %138 = vmatpush1.msra.mxu0 0.0
    %139 = vmatprep.subr.mxu0 0.0
    %140 = vmatpush1.msra.mxu0 0.0
    %141 = vmatprep.subr.mxu0 0.0
    %142 = vmatpush1.msra.mxu0 0.0
    %143 = vmatprep.subr.mxu0 0.0
    %144 = vmatpush1.msra.mxu0 0.0
    %145 = vmatprep.subr.mxu0 0.0
    %146 = vmatpush1.msra.mxu0 0.0
    %147 = vmatprep.subr.mxu0 0.0
    %148 = vmatpush1.msra.mxu0 0.0
    %149 = vmatprep.subr.mxu0 0.0
    %150 = vmatpush1.msra.mxu0 0.0
    %151 = vmatprep.subr.mxu0 0.0
    %152 = vmatpush1.msra.mxu0 0.0
    %153 = vmatprep.subr.mxu0 0.0
    %154 = vmatpush1.msra.mxu0 0.0
    %155 = vmatprep.subr.mxu0 0.0
    %156 = vmatpush1.msra.mxu0 0.0
    %157 = vmatprep.subr.mxu0 0.0
    %158 = vmatpush1.msra.mxu0 0.0
    %159 = vmatprep.mubr.f32.mxu0 0.0
    %160 = vmatmul.mubr.f32.gmra.mrb[0].mxu0 %v72
    %v161 = vpop.f32.mrb[0].mxu0
    %v162 = vadd.f32 %v63, %v161
    %v163 = vpop.f32.mrb[0].mxu0
    %v164 = vadd.f32 %v67, %v163
    %165 = vmatprep.mubr.f32.mxu0 0.0
    %166 = vmatmul.mubr.f32.gmra.mrb[0].mxu0 %v75
    %v167 = vpop.f32.mrb[0].mxu0
    %v168 = vadd.f32 %v63, %v167
    %v169 = vpop.f32.mrb[0].mxu0
    %v170 = vadd.f32 %v67, %v169
    %171 = vmatprep.mubr.f32.mxu0 0.0
    %172 = vmatmul.mubr.f32.gmra.mrb[0].mxu0 %v78
    %v173 = vpop.f32.mrb[0].mxu0
    %v174 = vadd.f32 %v63, %v173
    %v175 = vpop.f32.mrb[0].mxu0
    %v176 = vadd.f32 %v67, %v175
    %177 = vmatprep.mubr.f32.mxu0 0.0
    %178 = vmatmul.mubr.f32.gmra.mrb[0].mxu0 %v81
    %v179 = vpop.f32.mrb[0].mxu0
    %v180 = vadd.f32 %v63, %v179
    %v181 = vpop.f32.mrb[0].mxu0
    %v182 = vadd.f32 %v67, %v181
    %183 = vmatprep.mubr.f32.mxu0 0.0
    %184 = vmatmul.mubr.f32.gmra.mrb[0].mxu0 %v84
    %v185 = vpop.f32.mrb[0].mxu0
    %v186 = vadd.f32 %v63, %v185
    %v187 = vpop.f32.mrb[0].mxu0
    %v188 = vadd.f32 %v67, %v187
    %189 = vmatprep.mubr.f32.mxu0 0.0
    %190 = vmatmul.mubr.f32.gmra.mrb[0].mxu0 %v87
    %v191 = vpop.f32.mrb[0].mxu0
    %v192 = vadd.f32 %v63, %v191
    %v193 = vpop.f32.mrb[0].mxu0
    %v194 = vadd.f32 %v67, %v193
    %195 = vmatprep.mubr.f32.mxu0 0.0
    %196 = vmatmul.mubr.f32.gmra.mrb[0].mxu0 %v90
    %v197 = vpop.f32.mrb[0].mxu0
    %v198 = vadd.f32 %v63, %v197
    %v199 = vpop.f32.mrb[0].mxu0
    %v200 = vadd.f32 %v67, %v199
    %201 = vmatprep.mubr.f32.mxu0 0.0
    %202 = vmatmul.mubr.f32.gmra.mrb[0].mxu0 %v93
    %v203 = vpop.f32.mrb[0].mxu0
    %v204 = vadd.f32 %v63, %v203
    %v205 = vpop.f32.mrb[0].mxu0
    %v206 = vadd.f32 %v67, %v205
    %207 = vdwg.mxu0
    %208 = vst [vmem:[#allocation2] sm:$0xff] %v162
    %209 = vst [vmem:[#allocation2 + $0x8] sm:$0xff] %v164
    %210 = vst [vmem:[#allocation2 + $0x10] sm:$0xff] %v168
    %211 = vst [vmem:[#allocation2 + $0x18] sm:$0xff] %v170
    %212 = vst [vmem:[#allocation2 + $0x20] sm:$0xff] %v174
    %213 = vst [vmem:[#allocation2 + $0x28] sm:$0xff] %v176
    %214 = vst [vmem:[#allocation2 + $0x30] sm:$0xff] %v180
    %215 = vst [vmem:[#allocation2 + $0x38] sm:$0xff] %v182
    %216 = vst [vmem:[#allocation2 + $0x40] sm:$0xff] %v186
    %217 = vst [vmem:[#allocation2 + $0x48] sm:$0xff] %v188
    %218 = vst [vmem:[#allocation2 + $0x50] sm:$0xff] %v192
    %219 = vst [vmem:[#allocation2 + $0x58] sm:$0xff] %v194
    %220 = vst [vmem:[#allocation2 + $0x60] sm:$0xff] %v198
    %221 = vst [vmem:[#allocation2 + $0x68] sm:$0xff] %v200
    %222 = vst [vmem:[#allocation2 + $0x70] sm:$0xff] %v204
    %223 = vst [vmem:[#allocation2 + $0x78] sm:$0xff] %v206
    %v224 = vld [vmem:[%s43] sm:$0xff]
    %v225 = vld [vmem:[%s43 + $0x8] sm:$0xff]
    %v226 = vld [vmem:[%s43 + $0x10] sm:$0xff]
    %v227 = vld [vmem:[%s43 + $0x18] sm:$0xff]
    %v228 = vld [vmem:[%s43 + $0x20] sm:$0xff]
    %v229 = vld [vmem:[%s43 + $0x28] sm:$0xff]
    %v230 = vld [vmem:[%s43 + $0x30] sm:$0xff]
    %v231 = vld [vmem:[%s43 + $0x38] sm:$0xff]
    %v232 = vld [vmem:[%s3] sm:$0xff]
    %v233 = vld [vmem:[%s3 + $0x8] sm:$0xff]
    %v234 = vld [vmem:[%s3 + $0x10] sm:$0xff]
    %v235 = vld [vmem:[%s3 + $0x18] sm:$0xff]
    %v237 = vsel %vm70, %v224, 0
    %v240 = vsel %vm70, %v225, 0
    %v243 = vsel %vm70, %v226, 0
    %v246 = vsel %vm70, %v227, 0
    %v249 = vsel %vm70, %v228, 0
    %v252 = vsel %vm70, %v229, 0
    %v255 = vsel %vm70, %v230, 0
    %v258 = vsel %vm70, %v231, 0
    %260 = vmatprep.subr.mxu0 %v233
    %261 = vmatpush1.msra.mxu0 %v232
    %262 = vmatprep.subr.mxu0 %v235
    %263 = vmatpush1.msra.mxu0 %v234
    %264 = vmatprep.subr.mxu0 0.0
    %265 = vmatpush1.msra.mxu0 0.0
    %266 = vmatprep.subr.mxu0 0.0
    %267 = vmatpush1.msra.mxu0 0.0
    %268 = vmatprep.subr.mxu0 0.0
    %269 = vmatpush1.msra.mxu0 0.0
    %270 = vmatprep.subr.mxu0 0.0
    %271 = vmatpush1.msra.mxu0 0.0
    %272 = vmatprep.subr.mxu0 0.0
    %273 = vmatpush1.msra.mxu0 0.0
    %274 = vmatprep.subr.mxu0 0.0
    %275 = vmatpush1.msra.mxu0 0.0
    %276 = vmatprep.subr.mxu0 0.0
    %277 = vmatpush1.msra.mxu0 0.0
    %278 = vmatprep.subr.mxu0 0.0
    %279 = vmatpush1.msra.mxu0 0.0
    %280 = vmatprep.subr.mxu0 0.0
    %281 = vmatpush1.msra.mxu0 0.0
    %282 = vmatprep.subr.mxu0 0.0
    %283 = vmatpush1.msra.mxu0 0.0
    %284 = vmatprep.subr.mxu0 0.0
    %285 = vmatpush1.msra.mxu0 0.0
    %286 = vmatprep.subr.mxu0 0.0
    %287 = vmatpush1.msra.mxu0 0.0
    %288 = vmatprep.subr.mxu0 0.0
    %289 = vmatpush1.msra.mxu0 0.0
    %290 = vmatprep.subr.mxu0 0.0
    %291 = vmatpush1.msra.mxu0 0.0
    %292 = vmatprep.subr.mxu0 0.0
    %293 = vmatpush1.msra.mxu0 0.0
    %294 = vmatprep.subr.mxu0 0.0
    %295 = vmatpush1.msra.mxu0 0.0
    %296 = vmatprep.subr.mxu0 0.0
    %297 = vmatpush1.msra.mxu0 0.0
    %298 = vmatprep.subr.mxu0 0.0
    %299 = vmatpush1.msra.mxu0 0.0
    %300 = vmatprep.subr.mxu0 0.0
    %301 = vmatpush1.msra.mxu0 0.0
    %302 = vmatprep.subr.mxu0 0.0
    %303 = vmatpush1.msra.mxu0 0.0
    %304 = vmatprep.subr.mxu0 0.0
    %305 = vmatpush1.msra.mxu0 0.0
    %306 = vmatprep.subr.mxu0 0.0
    %307 = vmatpush1.msra.mxu0 0.0
    %308 = vmatprep.subr.mxu0 0.0
    %309 = vmatpush1.msra.mxu0 0.0
    %310 = vmatprep.subr.mxu0 0.0
    %311 = vmatpush1.msra.mxu0 0.0
    %312 = vmatprep.subr.mxu0 0.0
    %313 = vmatpush1.msra.mxu0 0.0
    %314 = vmatprep.subr.mxu0 0.0
    %315 = vmatpush1.msra.mxu0 0.0
    %316 = vmatprep.subr.mxu0 0.0
    %317 = vmatpush1.msra.mxu0 0.0
    %318 = vmatprep.subr.mxu0 0.0
    %319 = vmatpush1.msra.mxu0 0.0
    %320 = vmatprep.subr.mxu0 0.0
    %321 = vmatpush1.msra.mxu0 0.0
    %322 = vmatprep.subr.mxu0 0.0
    %323 = vmatpush1.msra.mxu0 0.0
    %324 = vmatprep.mubr.f32.mxu0 0.0
    %325 = vmatmul.mubr.f32.gmra.mrb[0].mxu0 %v237
    %v326 = vpop.f32.mrb[0].mxu0
    %v327 = vadd.f32 %v63, %v326
    %v328 = vpop.f32.mrb[0].mxu0
    %v329 = vadd.f32 %v67, %v328
    %330 = vmatprep.mubr.f32.mxu0 0.0
    %331 = vmatmul.mubr.f32.gmra.mrb[0].mxu0 %v240
    %v332 = vpop.f32.mrb[0].mxu0
    %v333 = vadd.f32 %v63, %v332
    %v334 = vpop.f32.mrb[0].mxu0
    %v335 = vadd.f32 %v67, %v334
    %336 = vmatprep.mubr.f32.mxu0 0.0
    %337 = vmatmul.mubr.f32.gmra.mrb[0].mxu0 %v243
    %v338 = vpop.f32.mrb[0].mxu0
    %v339 = vadd.f32 %v63, %v338
    %v340 = vpop.f32.mrb[0].mxu0
    %v341 = vadd.f32 %v67, %v340
    %342 = vmatprep.mubr.f32.mxu0 0.0
    %343 = vmatmul.mubr.f32.gmra.mrb[0].mxu0 %v246
    %v344 = vpop.f32.mrb[0].mxu0
    %v345 = vadd.f32 %v63, %v344
    %v346 = vpop.f32.mrb[0].mxu0
    %v347 = vadd.f32 %v67, %v346
    %348 = vmatprep.mubr.f32.mxu0 0.0
    %349 = vmatmul.mubr.f32.gmra.mrb[0].mxu0 %v249
    %v350 = vpop.f32.mrb[0].mxu0
    %v351 = vadd.f32 %v63, %v350
    %v352 = vpop.f32.mrb[0].mxu0
    %v353 = vadd.f32 %v67, %v352
    %354 = vmatprep.mubr.f32.mxu0 0.0
    %355 = vmatmul.mubr.f32.gmra.mrb[0].mxu0 %v252
    %v356 = vpop.f32.mrb[0].mxu0
    %v357 = vadd.f32 %v63, %v356
    %v358 = vpop.f32.mrb[0].mxu0
    %v359 = vadd.f32 %v67, %v358
    %360 = vmatprep.mubr.f32.mxu0 0.0
    %361 = vmatmul.mubr.f32.gmra.mrb[0].mxu0 %v255
    %v362 = vpop.f32.mrb[0].mxu0
    %v363 = vadd.f32 %v63, %v362
    %v364 = vpop.f32.mrb[0].mxu0
    %v365 = vadd.f32 %v67, %v364
    %366 = vmatprep.mubr.f32.mxu0 0.0
    %367 = vmatmul.mubr.f32.gmra.mrb[0].mxu0 %v258
    %v368 = vpop.f32.mrb[0].mxu0
    %v369 = vadd.f32 %v63, %v368
    %v370 = vpop.f32.mrb[0].mxu0
    %v371 = vadd.f32 %v67, %v370
    %372 = vdwg.mxu0
    %373 = vst [vmem:[#allocation3] sm:$0xff] %v327
    %374 = vst [vmem:[#allocation3 + $0x8] sm:$0xff] %v329
    %375 = vst [vmem:[#allocation3 + $0x10] sm:$0xff] %v333
    %376 = vst [vmem:[#allocation3 + $0x18] sm:$0xff] %v335
    %377 = vst [vmem:[#allocation3 + $0x20] sm:$0xff] %v339
    %378 = vst [vmem:[#allocation3 + $0x28] sm:$0xff] %v341
    %379 = vst [vmem:[#allocation3 + $0x30] sm:$0xff] %v345
    %380 = vst [vmem:[#allocation3 + $0x38] sm:$0xff] %v347
    %381 = vst [vmem:[#allocation3 + $0x40] sm:$0xff] %v351
    %382 = vst [vmem:[#allocation3 + $0x48] sm:$0xff] %v353
    %383 = vst [vmem:[#allocation3 + $0x50] sm:$0xff] %v357
    %384 = vst [vmem:[#allocation3 + $0x58] sm:$0xff] %v359
    %385 = vst [vmem:[#allocation3 + $0x60] sm:$0xff] %v363
    %386 = vst [vmem:[#allocation3 + $0x68] sm:$0xff] %v365
    %387 = vst [vmem:[#allocation3 + $0x70] sm:$0xff] %v369
    %388 = vst [vmem:[#allocation3 + $0x78] sm:$0xff] %v371
    %v389 = vld [vmem:[%s4] sm:$0xff]
    %v390 = vld [vmem:[%s4 + $0x8] sm:$0xff]
    %v391 = vld [vmem:[%s4 + $0x10] sm:$0xff]
    %v392 = vld [vmem:[%s4 + $0x18] sm:$0xff]
    %v393 = vld [vmem:[%s4 + $0x20] sm:$0xff]
    %v394 = vld [vmem:[%s4 + $0x28] sm:$0xff]
    %v395 = vld [vmem:[%s4 + $0x30] sm:$0xff]
    %v396 = vld [vmem:[%s4 + $0x38] sm:$0xff]
    %v397 = vld [vmem:[%s0] sm:$0xff]
    %v398 = vlaneseq
    %v399 = vshrl.u32 %v398, 7
    %v400 = vadd.s32 %v399, 8
    %vm401 = vcmp.lt.s32.totalorder %v399, 8
    %vm402 = vcmp.lt.s32.totalorder %v400, 8
    %v403 = vlaneseq
    %v404 = vand.u32 %v403, 127
    %v405 = vadd.s32 %v404, 128
    %vm406 = vcmp.lt.s32.totalorder %v404, 0
    %v407 = vsub.s32 0, %v404
    %v408 = vsel %vm406, %v407, %v404
    %v409 = vshrl.u32 %v408, 7
    %v410 = vand.u32 %v408, 127
    %v411 = vsub.s32 0, %v410
    %v412 = vsel %vm406, %v411, %v410
    %vm413 = vcmp.lt.s32.totalorder %v405, 0
    %v414 = vsub.s32 0, %v405
    %v415 = vsel %vm413, %v414, %v405
    %v416 = vshrl.u32 %v415, 7
    %v417 = vand.u32 %v415, 127
    %v418 = vsub.s32 0, %v417
    %v419 = vsel %vm413, %v418, %v417
    %vm420 = vcmp.ne.s32.totalorder %v412, 0
    %vm421 = vcmp.ne.s32.totalorder %v419, 0
    %vm422 = vcmp.lt.s32.totalorder %v412, 0
    %vm423 = vcmp.lt.s32.totalorder %v419, 0
    %vm424 = vmand %vm422, %vm420
    %vm425 = vmand %vm423, %vm421
    %v426 = vadd.s32 %v412, 128
    %v427 = vadd.s32 %v419, 128
    %v428 = vsel %vm424, %v426, %v412
    %v429 = vsel %vm425, %v427, %v419
    %vm430 = vcmp.ge.s32.totalorder %v428, 64
    %vm431 = vcmp.ge.s32.totalorder %v429, 64
    %vm432 = vcmp.lt.s32.totalorder %v428, 96
    %vm433 = vcmp.lt.s32.totalorder %v429, 96
    %vm434 = vmand %vm430, %vm432
    %vm435 = vmand %vm431, %vm433
    %p436 = scmp.eq.s32.totalorder 0, 0
    // Predicated region
    $region26: #{tpu_custom_call.1} parent=1 // pred_check
      %p437 = pneg %p436
    $region27: #{tpu_custom_call.1} parent=1 // pred_check_branch
      %439 = sbr.rel (%p437) target = $region29
    $region28: #{tpu_custom_call.1} parent=1 // pred_region
      %vm440 = vcmask 261120
      %441 = vst.msk [vmem:[#allocation4] sm:$0xff] %vm440, 0.0
      %442 = vst.msk [vmem:[#allocation4 + $0x8] sm:$0xff] %vm440, 0.0
      %443 = vst.msk [vmem:[#allocation5] sm:$0xff] %vm440, 0.0
      %444 = vst.msk [vmem:[#allocation5 + $0x8] sm:$0xff] %vm440, 0.0
    $region29: #{tpu_custom_call.1} parent=1 // pred_fallthru
      _
    %v445 = vld [vmem:[#allocation4] sm:$0xff]
    %v446 = vld [vmem:[#allocation4 + $0x8] sm:$0xff]
    %v447 = vld [vmem:[#allocation5] sm:$0xff]
    %v448 = vld [vmem:[#allocation5 + $0x8] sm:$0xff]
    %s449 = smul.u32 0, 2
    %s450 = smul.addr %s449, 8
    %s451 = scalar_lea.vmem [#allocation2], %s450
    %v452 = vld [vmem:[%s451] sm:$0xff]
    %v453 = vld [vmem:[%s451 + $0x8] sm:$0xff]
    %s454 = smul.u32 7, 2
    %s455 = smul.addr %s454, 8
    %s456 = scalar_lea.vmem [#allocation3], %s455
    %v457 = vld [vmem:[%s456] sm:$0xff]
    %v458 = vld [vmem:[%s456 + $0x8] sm:$0xff]
    %vm459 = vcmask 261120
    %v461 = vsel %vm459, %v445, 0
    %v464 = vsel %vm459, %v446, 0
    %466 = vmatprep.subr.mxu0 %v390
    %467 = vmatpush1.msra.mxu0 %v389
    %468 = vmatprep.subr.mxu0 %v392
    %469 = vmatpush1.msra.mxu0 %v391
    %470 = vmatprep.subr.mxu0 %v394
    %471 = vmatpush1.msra.mxu0 %v393
    %472 = vmatprep.subr.mxu0 %v396
    %473 = vmatpush1.msra.mxu0 %v395
    %474 = vmatprep.subr.mxu0 0.0
    %475 = vmatpush1.msra.mxu0 0.0
    %476 = vmatprep.subr.mxu0 0.0
    %477 = vmatpush1.msra.mxu0 0.0
    %478 = vmatprep.subr.mxu0 0.0
    %479 = vmatpush1.msra.mxu0 0.0
    %480 = vmatprep.subr.mxu0 0.0
    %481 = vmatpush1.msra.mxu0 0.0
    %482 = vmatprep.subr.mxu0 0.0
    %483 = vmatpush1.msra.mxu0 0.0
    %484 = vmatprep.subr.mxu0 0.0
    %485 = vmatpush1.msra.mxu0 0.0
    %486 = vmatprep.subr.mxu0 0.0
    %487 = vmatpush1.msra.mxu0 0.0
    %488 = vmatprep.subr.mxu0 0.0
    %489 = vmatpush1.msra.mxu0 0.0
    %490 = vmatprep.subr.mxu0 0.0
    %491 = vmatpush1.msra.mxu0 0.0
    %492 = vmatprep.subr.mxu0 0.0
    %493 = vmatpush1.msra.mxu0 0.0
    %494 = vmatprep.subr.mxu0 0.0
    %495 = vmatpush1.msra.mxu0 0.0
    %496 = vmatprep.subr.mxu0 0.0
    %497 = vmatpush1.msra.mxu0 0.0
    %498 = vmatprep.subr.mxu0 0.0
    %499 = vmatpush1.msra.mxu0 0.0
    %500 = vmatprep.subr.mxu0 0.0
    %501 = vmatpush1.msra.mxu0 0.0
    %502 = vmatprep.subr.mxu0 0.0
    %503 = vmatpush1.msra.mxu0 0.0
    %504 = vmatprep.subr.mxu0 0.0
    %505 = vmatpush1.msra.mxu0 0.0
    %506 = vmatprep.subr.mxu0 0.0
    %507 = vmatpush1.msra.mxu0 0.0
    %508 = vmatprep.subr.mxu0 0.0
    %509 = vmatpush1.msra.mxu0 0.0
    %510 = vmatprep.subr.mxu0 0.0
    %511 = vmatpush1.msra.mxu0 0.0
    %512 = vmatprep.subr.mxu0 0.0
    %513 = vmatpush1.msra.mxu0 0.0
    %514 = vmatprep.subr.mxu0 0.0
    %515 = vmatpush1.msra.mxu0 0.0
    %516 = vmatprep.subr.mxu0 0.0
    %517 = vmatpush1.msra.mxu0 0.0
    %518 = vmatprep.subr.mxu0 0.0
    %519 = vmatpush1.msra.mxu0 0.0
    %520 = vmatprep.subr.mxu0 0.0
    %521 = vmatpush1.msra.mxu0 0.0
    %522 = vmatprep.subr.mxu0 0.0
    %523 = vmatpush1.msra.mxu0 0.0
    %524 = vmatprep.subr.mxu0 0.0
    %525 = vmatpush1.msra.mxu0 0.0
    %526 = vmatprep.subr.mxu0 0.0
    %527 = vmatpush1.msra.mxu0 0.0
    %528 = vmatprep.subr.mxu0 0.0
    %529 = vmatpush1.msra.mxu0 0.0
    %530 = vmatprep.mubr.f32.mxu0 0.0
    %531 = vmatmul.mubr.f32.gmra.mrb[0].mxu0 %v461
    %v532 = vpop.f32.mrb[0].mxu0
    %v533 = vadd.f32 0.0, %v532
    %v534 = vpop.f32.mrb[0].mxu0
    %v535 = vadd.f32 0.0, %v534
    %536 = vmatprep.mubr.f32.mxu0 0.0
    %537 = vmatmul.mubr.f32.gmra.mrb[0].mxu0 %v464
    %v538 = vpop.f32.mrb[0].mxu0
    %v539 = vadd.f32 0.0, %v538
    %v540 = vpop.f32.mrb[0].mxu0
    %v541 = vadd.f32 0.0, %v540
    %542 = vdwg.mxu0
    %v543 = vadd.f32 %v452, %v533
    %v544 = vadd.f32 %v453, %v535
    %v545 = vadd.f32 %v457, %v539
    %v546 = vadd.f32 %v458, %v541
    %v547 = vtanh.pop %v543
    %v548 = vtanh.pop %v544
    %v549 = vtanh.pop %v545
    %v550 = vtanh.pop %v546
    %v551 = vxor.u32 %v543, 2147483648
    %v552 = vxor.u32 %v544, 2147483648
    %v553 = vxor.u32 %v545, 2147483648
    %v554 = vxor.u32 %v546, 2147483648
    %v555 = vmul.f32 %v551, 1.442695
    %v556 = vpow.pop %v555
    %v557 = vmul.f32 %v552, 1.442695
    %v558 = vpow.pop %v557
    %v559 = vmul.f32 %v553, 1.442695
    %v560 = vpow.pop %v559
    %v561 = vmul.f32 %v554, 1.442695
    %v562 = vpow.pop %v561
    %v563 = vadd.f32 %v556, 1.0
    %v564 = vadd.f32 %v558, 1.0
    %v565 = vadd.f32 %v560, 1.0
    %v566 = vadd.f32 %v562, 1.0
    %v567 = vrcp.pop %v563
    %v568 = vmul.f32 1.0, %v567
    %v569 = vrcp.pop %v564
    %v570 = vmul.f32 1.0, %v569
    %v571 = vrcp.pop %v565
    %v572 = vmul.f32 1.0, %v571
    %v573 = vrcp.pop %v566
    %v574 = vmul.f32 1.0, %v573
    %v575 = vsel %vm434, %v547, %v568
    %v576 = vsel %vm435, %v548, %v570
    %v577 = vsel %vm434, %v549, %v572
    %v578 = vsel %vm435, %v550, %v574
    %v579 = vsel %vm401, 1, 0
    %v580 = vsel %vm402, 1, 0
    %vm581 = vcmp.eq.s32.totalorder %v579, 1
    %vm582 = vcmp.eq.s32.totalorder %v580, 1
    %v583 = vsel %vm581, %v575, %v576
    %v584 = vsel %vm582, %v577, %v578
    %587 = vrot.lane.b32.xlu0 %v447, 32
    %v588 = vpop.permute.xlu0 %587
    %589 = vrot.lane.b32.xlu0 %v448, 32
    %v590 = vpop.permute.xlu0 %589
    %v593 = vmul.f32 %v583, %v588
    %v594 = vmul.f32 %v584, %v590
    %597 = vrot.lane.b32.xlu0 %v583, 64
    %v598 = vpop.permute.xlu0 %597
    %599 = vrot.lane.b32.xlu0 %v584, 64
    %v600 = vpop.permute.xlu0 %599
    %v603 = vmul.f32 %v583, %v598
    %v604 = vmul.f32 %v584, %v600
    %607 = vrot.lane.b32.xlu0 %v603, 32
    %v608 = vpop.permute.xlu0 %607
    %609 = vrot.lane.b32.xlu0 %v604, 32
    %v610 = vpop.permute.xlu0 %609
    %v613 = vadd.f32 %v593, %v608
    %v614 = vadd.f32 %v594, %v610
    %v615 = vtanh.pop %v613
    %v616 = vtanh.pop %v614
    %619 = vrot.lane.b32.xlu0 %v615, 64
    %v620 = vpop.permute.xlu0 %619
    %621 = vrot.lane.b32.xlu0 %v616, 64
    %v622 = vpop.permute.xlu0 %621
    %v625 = vmul.f32 %v583, %v620
    %v626 = vmul.f32 %v584, %v622
    %s627 = smul.u32 0, 8
    %s628 = ssub.s32 7, %s627
    %v629 = vstv %s627
    %v630 = vstv %s628
    %v631 = vsel %vm401, %v629, %v630
    %v632 = vsel %vm402, %v629, %v630
    %vm633 = vcmp.lt.s32.totalorder %v631, %v397
    %vm634 = vcmp.lt.s32.totalorder %v632, %v397
    %v635 = vsel %vm633, 1, 0
    %v636 = vsel %vm634, 1, 0
    %637 = vset.pattern.permute.xlu0 0
    %638 = vperm.xlu0 %637, %v635
    %v639 = vpop.permute.xlu0 %638
    %640 = vset.pattern.permute.xlu0 0
    %641 = vperm.xlu0 %640, %v636
    %v642 = vpop.permute.xlu0 %641
    %vm643 = vcmp.eq.s32.totalorder %v639, 1
    %vm644 = vcmp.eq.s32.totalorder %v642, 1
    %645 = vrot.lane.b32.xlu0 %v445, 96
    %v646 = vpop.permute.xlu0 %645
    %647 = vrot.lane.b32.xlu0 %v446, 96
    %v648 = vpop.permute.xlu0 %647
    %v651 = vsel %vm643, %v625, %v646
    %v652 = vsel %vm644, %v626, %v648
    %v653 = vsel %vm643, %v613, %v588
    %v654 = vsel %vm644, %v614, %v590
    %s655 = smul.u32 1, 2
    %s656 = smul.addr %s655, 8
    %s657 = scalar_lea.vmem [#allocation2], %s656
    %v658 = vld [vmem:[%s657] sm:$0xff]
    %v659 = vld [vmem:[%s657 + $0x8] sm:$0xff]
    %s660 = smul.u32 6, 2
    %s661 = smul.addr %s660, 8
    %s662 = scalar_lea.vmem [#allocation3], %s661
    %v663 = vld [vmem:[%s662] sm:$0xff]
    %v664 = vld [vmem:[%s662 + $0x8] sm:$0xff]
    %667 = vrot.lane.b32.xlu0 %v651, 32
    %v668 = vpop.permute.xlu0 %667
    %669 = vrot.lane.b32.xlu0 %v652, 32
    %v670 = vpop.permute.xlu0 %669
    %v671 = vsel %vm459, %v668, 0
    %v673 = vsel %vm459, %v670, 0
    %675 = vmatprep.subr.mxu0 %v390
    %676 = vmatpush1.msra.mxu0 %v389
    %677 = vmatprep.subr.mxu0 %v392
    %678 = vmatpush1.msra.mxu0 %v391
    %679 = vmatprep.subr.mxu0 %v394
    %680 = vmatpush1.msra.mxu0 %v393
    %681 = vmatprep.subr.mxu0 %v396
    %682 = vmatpush1.msra.mxu0 %v395
    %683 = vmatprep.subr.mxu0 0.0
    %684 = vmatpush1.msra.mxu0 0.0
    %685 = vmatprep.subr.mxu0 0.0
    %686 = vmatpush1.msra.mxu0 0.0
    %687 = vmatprep.subr.mxu0 0.0
    %688 = vmatpush1.msra.mxu0 0.0
    %689 = vmatprep.subr.mxu0 0.0
    %690 = vmatpush1.msra.mxu0 0.0
    %691 = vmatprep.subr.mxu0 0.0
    %692 = vmatpush1.msra.mxu0 0.0
    %693 = vmatprep.subr.mxu0 0.0
    %694 = vmatpush1.msra.mxu0 0.0
    %695 = vmatprep.subr.mxu0 0.0
    %696 = vmatpush1.msra.mxu0 0.0
    %697 = vmatprep.subr.mxu0 0.0
    %698 = vmatpush1.msra.mxu0 0.0
    %699 = vmatprep.subr.mxu0 0.0
    %700 = vmatpush1.msra.mxu0 0.0
    %701 = vmatprep.subr.mxu0 0.0
    %702 = vmatpush1.msra.mxu0 0.0
    %703 = vmatprep.subr.mxu0 0.0
    %704 = vmatpush1.msra.mxu0 0.0
    %705 = vmatprep.subr.mxu0 0.0
    %706 = vmatpush1.msra.mxu0 0.0
    %707 = vmatprep.subr.mxu0 0.0
    %708 = vmatpush1.msra.mxu0 0.0
    %709 = vmatprep.subr.mxu0 0.0
    %710 = vmatpush1.msra.mxu0 0.0
    %711 = vmatprep.subr.mxu0 0.0
    %712 = vmatpush1.msra.mxu0 0.0
    %713 = vmatprep.subr.mxu0 0.0
    %714 = vmatpush1.msra.mxu0 0.0
    %715 = vmatprep.subr.mxu0 0.0
    %716 = vmatpush1.msra.mxu0 0.0
    %717 = vmatprep.subr.mxu0 0.0
    %718 = vmatpush1.msra.mxu0 0.0
    %719 = vmatprep.subr.mxu0 0.0
    %720 = vmatpush1.msra.mxu0 0.0
    %721 = vmatprep.subr.mxu0 0.0
    %722 = vmatpush1.msra.mxu0 0.0
    %723 = vmatprep.subr.mxu0 0.0
    %724 = vmatpush1.msra.mxu0 0.0
    %725 = vmatprep.subr.mxu0 0.0
    %726 = vmatpush1.msra.mxu0 0.0
    %727 = vmatprep.subr.mxu0 0.0
    %728 = vmatpush1.msra.mxu0 0.0
    %729 = vmatprep.subr.mxu0 0.0
    %730 = vmatpush1.msra.mxu0 0.0
    %731 = vmatprep.subr.mxu0 0.0
    %732 = vmatpush1.msra.mxu0 0.0
    %733 = vmatprep.subr.mxu0 0.0
    %734 = vmatpush1.msra.mxu0 0.0
    %735 = vmatprep.subr.mxu0 0.0
    %736 = vmatpush1.msra.mxu0 0.0
    %737 = vmatprep.subr.mxu0 0.0
    %738 = vmatpush1.msra.mxu0 0.0
    %739 = vmatprep.mubr.f32.mxu0 0.0
    %740 = vmatmul.mubr.f32.gmra.mrb[0].mxu0 %v671
    %v741 = vpop.f32.mrb[0].mxu0
    %v742 = vadd.f32 0.0, %v741
    %v743 = vpop.f32.mrb[0].mxu0
    %v744 = vadd.f32 0.0, %v743
    %745 = vmatprep.mubr.f32.mxu0 0.0
    %746 = vmatmul.mubr.f32.gmra.mrb[0].mxu0 %v673
    %v747 = vpop.f32.mrb[0].mxu0
    %v748 = vadd.f32 0.0, %v747
    %v749 = vpop.f32.mrb[0].mxu0
    %v750 = vadd.f32 0.0, %v749
    %751 = vdwg.mxu0
    %v752 = vadd.f32 %v658, %v742
    %v753 = vadd.f32 %v659, %v744
    %v754 = vadd.f32 %v663, %v748
    %v755 = vadd.f32 %v664, %v750
    %v756 = vtanh.pop %v752
    %v757 = vtanh.pop %v753
    %v758 = vtanh.pop %v754
    %v759 = vtanh.pop %v755
    %v760 = vxor.u32 %v752, 2147483648
    %v761 = vxor.u32 %v753, 2147483648
    %v762 = vxor.u32 %v754, 2147483648
    %v763 = vxor.u32 %v755, 2147483648
    %v764 = vmul.f32 %v760, 1.442695
    %v765 = vpow.pop %v764
    %v766 = vmul.f32 %v761, 1.442695
    %v767 = vpow.pop %v766
    %v768 = vmul.f32 %v762, 1.442695
    %v769 = vpow.pop %v768
    %v770 = vmul.f32 %v763, 1.442695
    %v771 = vpow.pop %v770
    %v772 = vadd.f32 %v765, 1.0
    %v773 = vadd.f32 %v767, 1.0
    %v774 = vadd.f32 %v769, 1.0
    %v775 = vadd.f32 %v771, 1.0
    %v776 = vrcp.pop %v772
    %v777 = vmul.f32 1.0, %v776
    %v778 = vrcp.pop %v773
    %v779 = vmul.f32 1.0, %v778
    %v780 = vrcp.pop %v774
    %v781 = vmul.f32 1.0, %v780
    %v782 = vrcp.pop %v775
    %v783 = vmul.f32 1.0, %v782
    %v784 = vsel %vm434, %v756, %v777
    %v785 = vsel %vm435, %v757, %v779
    %v786 = vsel %vm434, %v758, %v781
    %v787 = vsel %vm435, %v759, %v783
    %v788 = vsel %vm581, %v784, %v785
    %v789 = vsel %vm582, %v786, %v787
    %v790 = vmul.f32 %v788, %v653
    %v791 = vmul.f32 %v789, %v654
    %794 = vrot.lane.b32.xlu0 %v788, 64
    %v795 = vpop.permute.xlu0 %794
    %796 = vrot.lane.b32.xlu0 %v789, 64
    %v797 = vpop.permute.xlu0 %796
    %v800 = vmul.f32 %v788, %v795
    %v801 = vmul.f32 %v789, %v797
    %804 = vrot.lane.b32.xlu0 %v800, 32
    %v805 = vpop.permute.xlu0 %804
    %806 = vrot.lane.b32.xlu0 %v801, 32
    %v807 = vpop.permute.xlu0 %806
    %v810 = vadd.f32 %v790, %v805
    %v811 = vadd.f32 %v791, %v807
    %v812 = vtanh.pop %v810
    %v813 = vtanh.pop %v811
    %816 = vrot.lane.b32.xlu0 %v812, 64
    %v817 = vpop.permute.xlu0 %816
    %818 = vrot.lane.b32.xlu0 %v813, 64
    %v819 = vpop.permute.xlu0 %818
    %v822 = vmul.f32 %v788, %v817
    %v823 = vmul.f32 %v789, %v819
    %s824 = sadd.s32 %s627, 1
    %s825 = ssub.s32 6, %s627
    %v826 = vstv %s824
    %v827 = vstv %s825
    %v828 = vsel %vm401, %v826, %v827
    %v829 = vsel %vm402, %v826, %v827
    %vm830 = vcmp.lt.s32.totalorder %v828, %v397
    %vm831 = vcmp.lt.s32.totalorder %v829, %v397
    %v832 = vsel %vm830, 1, 0
    %v833 = vsel %vm831, 1, 0
    %834 = vset.pattern.permute.xlu0 0
    %835 = vperm.xlu0 %834, %v832
    %v836 = vpop.permute.xlu0 %835
    %837 = vset.pattern.permute.xlu0 0
    %838 = vperm.xlu0 %837, %v833
    %v839 = vpop.permute.xlu0 %838
    %vm840 = vcmp.eq.s32.totalorder %v836, 1
    %vm841 = vcmp.eq.s32.totalorder %v839, 1
    %v842 = vsel %vm840, %v822, %v651
    %v843 = vsel %vm841, %v823, %v652
    %v844 = vsel %vm840, %v810, %v653
    %v845 = vsel %vm841, %v811, %v654
    %s846 = smul.u32 2, 2
    %s847 = smul.addr %s846, 8
    %s848 = scalar_lea.vmem [#allocation2], %s847
    %v849 = vld [vmem:[%s848] sm:$0xff]
    %v850 = vld [vmem:[%s848 + $0x8] sm:$0xff]
    %s851 = smul.u32 5, 2
    %s852 = smul.addr %s851, 8
    %s853 = scalar_lea.vmem [#allocation3], %s852
    %v854 = vld [vmem:[%s853] sm:$0xff]
    %v855 = vld [vmem:[%s853 + $0x8] sm:$0xff]
    %858 = vrot.lane.b32.xlu0 %v842, 32
    %v859 = vpop.permute.xlu0 %858
    %860 = vrot.lane.b32.xlu0 %v843, 32
    %v861 = vpop.permute.xlu0 %860
    %v862 = vsel %vm459, %v859, 0
    %v864 = vsel %vm459, %v861, 0
    %866 = vmatprep.subr.mxu0 %v390
    %867 = vmatpush1.msra.mxu0 %v389
    %868 = vmatprep.subr.mxu0 %v392
    %869 = vmatpush1.msra.mxu0 %v391
    %870 = vmatprep.subr.mxu0 %v394
    %871 = vmatpush1.msra.mxu0 %v393
    %872 = vmatprep.subr.mxu0 %v396
    %873 = vmatpush1.msra.mxu0 %v395
    %874 = vmatprep.subr.mxu0 0.0
    %875 = vmatpush1.msra.mxu0 0.0
    %876 = vmatprep.subr.mxu0 0.0
    %877 = vmatpush1.msra.mxu0 0.0
    %878 = vmatprep.subr.mxu0 0.0
    %879 = vmatpush1.msra.mxu0 0.0
    %880 = vmatprep.subr.mxu0 0.0
    %881 = vmatpush1.msra.mxu0 0.0
    %882 = vmatprep.subr.mxu0 0.0
    %883 = vmatpush1.msra.mxu0 0.0
    %884 = vmatprep.subr.mxu0 0.0
    %885 = vmatpush1.msra.mxu0 0.0
    %886 = vmatprep.subr.mxu0 0.0
    %887 = vmatpush1.msra.mxu0 0.0
    %888 = vmatprep.subr.mxu0 0.0
    %889 = vmatpush1.msra.mxu0 0.0
    %890 = vmatprep.subr.mxu0 0.0
    %891 = vmatpush1.msra.mxu0 0.0
    %892 = vmatprep.subr.mxu0 0.0
    %893 = vmatpush1.msra.mxu0 0.0
    %894 = vmatprep.subr.mxu0 0.0
    %895 = vmatpush1.msra.mxu0 0.0
    %896 = vmatprep.subr.mxu0 0.0
    %897 = vmatpush1.msra.mxu0 0.0
    %898 = vmatprep.subr.mxu0 0.0
    %899 = vmatpush1.msra.mxu0 0.0
    %900 = vmatprep.subr.mxu0 0.0
    %901 = vmatpush1.msra.mxu0 0.0
    %902 = vmatprep.subr.mxu0 0.0
    %903 = vmatpush1.msra.mxu0 0.0
    %904 = vmatprep.subr.mxu0 0.0
    %905 = vmatpush1.msra.mxu0 0.0
    %906 = vmatprep.subr.mxu0 0.0
    %907 = vmatpush1.msra.mxu0 0.0
    %908 = vmatprep.subr.mxu0 0.0
    %909 = vmatpush1.msra.mxu0 0.0
    %910 = vmatprep.subr.mxu0 0.0
    %911 = vmatpush1.msra.mxu0 0.0
    %912 = vmatprep.subr.mxu0 0.0
    %913 = vmatpush1.msra.mxu0 0.0
    %914 = vmatprep.subr.mxu0 0.0
    %915 = vmatpush1.msra.mxu0 0.0
    %916 = vmatprep.subr.mxu0 0.0
    %917 = vmatpush1.msra.mxu0 0.0
    %918 = vmatprep.subr.mxu0 0.0
    %919 = vmatpush1.msra.mxu0 0.0
    %920 = vmatprep.subr.mxu0 0.0
    %921 = vmatpush1.msra.mxu0 0.0
    %922 = vmatprep.subr.mxu0 0.0
    %923 = vmatpush1.msra.mxu0 0.0
    %924 = vmatprep.subr.mxu0 0.0
    %925 = vmatpush1.msra.mxu0 0.0
    %926 = vmatprep.subr.mxu0 0.0
    %927 = vmatpush1.msra.mxu0 0.0
    %928 = vmatprep.subr.mxu0 0.0
    %929 = vmatpush1.msra.mxu0 0.0
    %930 = vmatprep.mubr.f32.mxu0 0.0
    %931 = vmatmul.mubr.f32.gmra.mrb[0].mxu0 %v862
    %v932 = vpop.f32.mrb[0].mxu0
    %v933 = vadd.f32 0.0, %v932
    %v934 = vpop.f32.mrb[0].mxu0
    %v935 = vadd.f32 0.0, %v934
    %936 = vmatprep.mubr.f32.mxu0 0.0
    %937 = vmatmul.mubr.f32.gmra.mrb[0].mxu0 %v864
    %v938 = vpop.f32.mrb[0].mxu0
    %v939 = vadd.f32 0.0, %v938
    %v940 = vpop.f32.mrb[0].mxu0
    %v941 = vadd.f32 0.0, %v940
    %942 = vdwg.mxu0
    %v943 = vadd.f32 %v849, %v933
    %v944 = vadd.f32 %v850, %v935
    %v945 = vadd.f32 %v854, %v939
    %v946 = vadd.f32 %v855, %v941
    %v947 = vtanh.pop %v943
    %v948 = vtanh.pop %v944
    %v949 = vtanh.pop %v945
    %v950 = vtanh.pop %v946
    %v951 = vxor.u32 %v943, 2147483648
    %v952 = vxor.u32 %v944, 2147483648
    %v953 = vxor.u32 %v945, 2147483648
    %v954 = vxor.u32 %v946, 2147483648
    %v955 = vmul.f32 %v951, 1.442695
    %v956 = vpow.pop %v955
    %v957 = vmul.f32 %v952, 1.442695
    %v958 = vpow.pop %v957
    %v959 = vmul.f32 %v953, 1.442695
    %v960 = vpow.pop %v959
    %v961 = vmul.f32 %v954, 1.442695
    %v962 = vpow.pop %v961
    %v963 = vadd.f32 %v956, 1.0
    %v964 = vadd.f32 %v958, 1.0
    %v965 = vadd.f32 %v960, 1.0
    %v966 = vadd.f32 %v962, 1.0
    %v967 = vrcp.pop %v963
    %v968 = vmul.f32 1.0, %v967
    %v969 = vrcp.pop %v964
    %v970 = vmul.f32 1.0, %v969
    %v971 = vrcp.pop %v965
    %v972 = vmul.f32 1.0, %v971
    %v973 = vrcp.pop %v966
    %v974 = vmul.f32 1.0, %v973
    %v975 = vsel %vm434, %v947, %v968
    %v976 = vsel %vm435, %v948, %v970
    %v977 = vsel %vm434, %v949, %v972
    %v978 = vsel %vm435, %v950, %v974
    %v979 = vsel %vm581, %v975, %v976
    %v980 = vsel %vm582, %v977, %v978
    %v981 = vmul.f32 %v979, %v844
    %v982 = vmul.f32 %v980, %v845
    %985 = vrot.lane.b32.xlu0 %v979, 64
    %v986 = vpop.permute.xlu0 %985
    %987 = vrot.lane.b32.xlu0 %v980, 64
    %v988 = vpop.permute.xlu0 %987
    %v991 = vmul.f32 %v979, %v986
    %v992 = vmul.f32 %v980, %v988
    %995 = vrot.lane.b32.xlu0 %v991, 32
    %v996 = vpop.permute.xlu0 %995
    %997 = vrot.lane.b32.xlu0 %v992, 32
    %v998 = vpop.permute.xlu0 %997
    %v1001 = vadd.f32 %v981, %v996
    %v1002 = vadd.f32 %v982, %v998
    %v1003 = vtanh.pop %v1001
    %v1004 = vtanh.pop %v1002
    %1007 = vrot.lane.b32.xlu0 %v1003, 64
    %v1008 = vpop.permute.xlu0 %1007
    %1009 = vrot.lane.b32.xlu0 %v1004, 64
    %v1010 = vpop.permute.xlu0 %1009
    %v1013 = vmul.f32 %v979, %v1008
    %v1014 = vmul.f32 %v980, %v1010
    %s1015 = sadd.s32 %s627, 2
    %s1016 = ssub.s32 5, %s627
    %v1017 = vstv %s1015
    %v1018 = vstv %s1016
    %v1019 = vsel %vm401, %v1017, %v1018
    %v1020 = vsel %vm402, %v1017, %v1018
    %vm1021 = vcmp.lt.s32.totalorder %v1019, %v397
    %vm1022 = vcmp.lt.s32.totalorder %v1020, %v397
    %v1023 = vsel %vm1021, 1, 0
    %v1024 = vsel %vm1022, 1, 0
    %1025 = vset.pattern.permute.xlu0 0
    %1026 = vperm.xlu0 %1025, %v1023
    %v1027 = vpop.permute.xlu0 %1026
    %1028 = vset.pattern.permute.xlu0 0
    %1029 = vperm.xlu0 %1028, %v1024
    %v1030 = vpop.permute.xlu0 %1029
    %vm1031 = vcmp.eq.s32.totalorder %v1027, 1
    %vm1032 = vcmp.eq.s32.totalorder %v1030, 1
    %v1033 = vsel %vm1031, %v1013, %v842
    %v1034 = vsel %vm1032, %v1014, %v843
    %v1035 = vsel %vm1031, %v1001, %v844
    %v1036 = vsel %vm1032, %v1002, %v845
    %s1037 = smul.u32 3, 2
    %s1038 = smul.addr %s1037, 8
    %s1039 = scalar_lea.vmem [#allocation2], %s1038
    %v1040 = vld [vmem:[%s1039] sm:$0xff]
    %v1041 = vld [vmem:[%s1039 + $0x8] sm:$0xff]
    %s1042 = smul.u32 4, 2
    %s1043 = smul.addr %s1042, 8
    %s1044 = scalar_lea.vmem [#allocation3], %s1043
    %v1045 = vld [vmem:[%s1044] sm:$0xff]
    %v1046 = vld [vmem:[%s1044 + $0x8] sm:$0xff]
    %1049 = vrot.lane.b32.xlu0 %v1033, 32
    %v1050 = vpop.permute.xlu0 %1049
    %1051 = vrot.lane.b32.xlu0 %v1034, 32
    %v1052 = vpop.permute.xlu0 %1051
    %v1053 = vsel %vm459, %v1050, 0
    %v1055 = vsel %vm459, %v1052, 0
    %1057 = vmatprep.subr.mxu0 %v390
    %1058 = vmatpush1.msra.mxu0 %v389
    %1059 = vmatprep.subr.mxu0 %v392
    %1060 = vmatpush1.msra.mxu0 %v391
    %1061 = vmatprep.subr.mxu0 %v394
    %1062 = vmatpush1.msra.mxu0 %v393
    %1063 = vmatprep.subr.mxu0 %v396
    %1064 = vmatpush1.msra.mxu0 %v395
    %1065 = vmatprep.subr.mxu0 0.0
    %1066 = vmatpush1.msra.mxu0 0.0
    %1067 = vmatprep.subr.mxu0 0.0
    %1068 = vmatpush1.msra.mxu0 0.0
    %1069 = vmatprep.subr.mxu0 0.0
    %1070 = vmatpush1.msra.mxu0 0.0
    %1071 = vmatprep.subr.mxu0 0.0
    %1072 = vmatpush1.msra.mxu0 0.0
    %1073 = vmatprep.subr.mxu0 0.0
    %1074 = vmatpush1.msra.mxu0 0.0
    %1075 = vmatprep.subr.mxu0 0.0
    %1076 = vmatpush1.msra.mxu0 0.0
    %1077 = vmatprep.subr.mxu0 0.0
    %1078 = vmatpush1.msra.mxu0 0.0
    %1079 = vmatprep.subr.mxu0 0.0
    %1080 = vmatpush1.msra.mxu0 0.0
    %1081 = vmatprep.subr.mxu0 0.0
    %1082 = vmatpush1.msra.mxu0 0.0
    %1083 = vmatprep.subr.mxu0 0.0
    %1084 = vmatpush1.msra.mxu0 0.0
    %1085 = vmatprep.subr.mxu0 0.0
    %1086 = vmatpush1.msra.mxu0 0.0
    %1087 = vmatprep.subr.mxu0 0.0
    %1088 = vmatpush1.msra.mxu0 0.0
    %1089 = vmatprep.subr.mxu0 0.0
    %1090 = vmatpush1.msra.mxu0 0.0
    %1091 = vmatprep.subr.mxu0 0.0
    %1092 = vmatpush1.msra.mxu0 0.0
    %1093 = vmatprep.subr.mxu0 0.0
    %1094 = vmatpush1.msra.mxu0 0.0
    %1095 = vmatprep.subr.mxu0 0.0
    %1096 = vmatpush1.msra.mxu0 0.0
    %1097 = vmatprep.subr.mxu0 0.0
    %1098 = vmatpush1.msra.mxu0 0.0
    %1099 = vmatprep.subr.mxu0 0.0
    %1100 = vmatpush1.msra.mxu0 0.0
    %1101 = vmatprep.subr.mxu0 0.0
    %1102 = vmatpush1.msra.mxu0 0.0
    %1103 = vmatprep.subr.mxu0 0.0
    %1104 = vmatpush1.msra.mxu0 0.0
    %1105 = vmatprep.subr.mxu0 0.0
    %1106 = vmatpush1.msra.mxu0 0.0
    %1107 = vmatprep.subr.mxu0 0.0
    %1108 = vmatpush1.msra.mxu0 0.0
    %1109 = vmatprep.subr.mxu0 0.0
    %1110 = vmatpush1.msra.mxu0 0.0
    %1111 = vmatprep.subr.mxu0 0.0
    %1112 = vmatpush1.msra.mxu0 0.0
    %1113 = vmatprep.subr.mxu0 0.0
    %1114 = vmatpush1.msra.mxu0 0.0
    %1115 = vmatprep.subr.mxu0 0.0
    %1116 = vmatpush1.msra.mxu0 0.0
    %1117 = vmatprep.subr.mxu0 0.0
    %1118 = vmatpush1.msra.mxu0 0.0
    %1119 = vmatprep.subr.mxu0 0.0
    %1120 = vmatpush1.msra.mxu0 0.0
    %1121 = vmatprep.mubr.f32.mxu0 0.0
    %1122 = vmatmul.mubr.f32.gmra.mrb[0].mxu0 %v1053
    %v1123 = vpop.f32.mrb[0].mxu0
    %v1124 = vadd.f32 0.0, %v1123
    %v1125 = vpop.f32.mrb[0].mxu0
    %v1126 = vadd.f32 0.0, %v1125
    %1127 = vmatprep.mubr.f32.mxu0 0.0
    %1128 = vmatmul.mubr.f32.gmra.mrb[0].mxu0 %v1055
    %v1129 = vpop.f32.mrb[0].mxu0
    %v1130 = vadd.f32 0.0, %v1129
    %v1131 = vpop.f32.mrb[0].mxu0
    %v1132 = vadd.f32 0.0, %v1131
    %1133 = vdwg.mxu0
    %v1134 = vadd.f32 %v1040, %v1124
    %v1135 = vadd.f32 %v1041, %v1126
    %v1136 = vadd.f32 %v1045, %v1130
    %v1137 = vadd.f32 %v1046, %v1132
    %v1138 = vtanh.pop %v1134
    %v1139 = vtanh.pop %v1135
    %v1140 = vtanh.pop %v1136
    %v1141 = vtanh.pop %v1137
    %v1142 = vxor.u32 %v1134, 2147483648
    %v1143 = vxor.u32 %v1135, 2147483648
    %v1144 = vxor.u32 %v1136, 2147483648
    %v1145 = vxor.u32 %v1137, 2147483648
    %v1146 = vmul.f32 %v1142, 1.442695
    %v1147 = vpow.pop %v1146
    %v1148 = vmul.f32 %v1143, 1.442695
    %v1149 = vpow.pop %v1148
    %v1150 = vmul.f32 %v1144, 1.442695
    %v1151 = vpow.pop %v1150
    %v1152 = vmul.f32 %v1145, 1.442695
    %v1153 = vpow.pop %v1152
    %v1154 = vadd.f32 %v1147, 1.0
    %v1155 = vadd.f32 %v1149, 1.0
    %v1156 = vadd.f32 %v1151, 1.0
    %v1157 = vadd.f32 %v1153, 1.0
    %v1158 = vrcp.pop %v1154
    %v1159 = vmul.f32 1.0, %v1158
    %v1160 = vrcp.pop %v1155
    %v1161 = vmul.f32 1.0, %v1160
    %v1162 = vrcp.pop %v1156
    %v1163 = vmul.f32 1.0, %v1162
    %v1164 = vrcp.pop %v1157
    %v1165 = vmul.f32 1.0, %v1164
    %v1166 = vsel %vm434, %v1138, %v1159
    %v1167 = vsel %vm435, %v1139, %v1161
    %v1168 = vsel %vm434, %v1140, %v1163
    %v1169 = vsel %vm435, %v1141, %v1165
    %v1170 = vsel %vm581, %v1166, %v1167
    %v1171 = vsel %vm582, %v1168, %v1169
    %v1172 = vmul.f32 %v1170, %v1035
    %v1173 = vmul.f32 %v1171, %v1036
    %1176 = vrot.lane.b32.xlu0 %v1170, 64
    %v1177 = vpop.permute.xlu0 %1176
    %1178 = vrot.lane.b32.xlu0 %v1171, 64
    %v1179 = vpop.permute.xlu0 %1178
    %v1182 = vmul.f32 %v1170, %v1177
    %v1183 = vmul.f32 %v1171, %v1179
    %1186 = vrot.lane.b32.xlu0 %v1182, 32
    %v1187 = vpop.permute.xlu0 %1186
    %1188 = vrot.lane.b32.xlu0 %v1183, 32
    %v1189 = vpop.permute.xlu0 %1188
    %v1192 = vadd.f32 %v1172, %v1187
    %v1193 = vadd.f32 %v1173, %v1189
    %v1194 = vtanh.pop %v1192
    %v1195 = vtanh.pop %v1193
    %1198 = vrot.lane.b32.xlu0 %v1194, 64
    %v1199 = vpop.permute.xlu0 %1198
    %1200 = vrot.lane.b32.xlu0 %v1195, 64
    %v1201 = vpop.permute.xlu0 %1200
    %v1204 = vmul.f32 %v1170, %v1199
    %v1205 = vmul.f32 %v1171, %v1201
    %s1206 = sadd.s32 %s627, 3
    %s1207 = ssub.s32 4, %s627
    %v1208 = vstv %s1206
    %v1209 = vstv %s1207
    %v1210 = vsel %vm401, %v1208, %v1209
    %v1211 = vsel %vm402, %v1208, %v1209
    %vm1212 = vcmp.lt.s32.totalorder %v1210, %v397
    %vm1213 = vcmp.lt.s32.totalorder %v1211, %v397
    %v1214 = vsel %vm1212, 1, 0
    %v1215 = vsel %vm1213, 1, 0
    %1216 = vset.pattern.permute.xlu0 0
    %1217 = vperm.xlu0 %1216, %v1214
    %v1218 = vpop.permute.xlu0 %1217
    %1219 = vset.pattern.permute.xlu0 0
    %1220 = vperm.xlu0 %1219, %v1215
    %v1221 = vpop.permute.xlu0 %1220
    %vm1222 = vcmp.eq.s32.totalorder %v1218, 1
    %vm1223 = vcmp.eq.s32.totalorder %v1221, 1
    %v1224 = vsel %vm1222, %v1204, %v1033
    %v1225 = vsel %vm1223, %v1205, %v1034
    %v1226 = vsel %vm1222, %v1192, %v1035
    %v1227 = vsel %vm1223, %v1193, %v1036
    %s1228 = smul.addr %s1042, 8
    %s1229 = scalar_lea.vmem [#allocation2], %s1228
    %v1230 = vld [vmem:[%s1229] sm:$0xff]
    %v1231 = vld [vmem:[%s1229 + $0x8] sm:$0xff]
    %s1232 = smul.addr %s1037, 8
    %s1233 = scalar_lea.vmem [#allocation3], %s1232
    %v1234 = vld [vmem:[%s1233] sm:$0xff]
    %v1235 = vld [vmem:[%s1233 + $0x8] sm:$0xff]
    %1238 = vrot.lane.b32.xlu0 %v1224, 32
    %v1239 = vpop.permute.xlu0 %1238
    %1240 = vrot.lane.b32.xlu0 %v1225, 32
    %v1241 = vpop.permute.xlu0 %1240
    %v1242 = vsel %vm459, %v1239, 0
    %v1244 = vsel %vm459, %v1241, 0
    %1246 = vmatprep.subr.mxu0 %v390
    %1247 = vmatpush1.msra.mxu0 %v389
    %1248 = vmatprep.subr.mxu0 %v392
    %1249 = vmatpush1.msra.mxu0 %v391
    %1250 = vmatprep.subr.mxu0 %v394
    %1251 = vmatpush1.msra.mxu0 %v393
    %1252 = vmatprep.subr.mxu0 %v396
    %1253 = vmatpush1.msra.mxu0 %v395
    %1254 = vmatprep.subr.mxu0 0.0
    %1255 = vmatpush1.msra.mxu0 0.0
    %1256 = vmatprep.subr.mxu0 0.0
    %1257 = vmatpush1.msra.mxu0 0.0
    %1258 = vmatprep.subr.mxu0 0.0
    %1259 = vmatpush1.msra.mxu0 0.0
    %1260 = vmatprep.subr.mxu0 0.0
    %1261 = vmatpush1.msra.mxu0 0.0
    %1262 = vmatprep.subr.mxu0 0.0
    %1263 = vmatpush1.msra.mxu0 0.0
    %1264 = vmatprep.subr.mxu0 0.0
    %1265 = vmatpush1.msra.mxu0 0.0
    %1266 = vmatprep.subr.mxu0 0.0
    %1267 = vmatpush1.msra.mxu0 0.0
    %1268 = vmatprep.subr.mxu0 0.0
    %1269 = vmatpush1.msra.mxu0 0.0
    %1270 = vmatprep.subr.mxu0 0.0
    %1271 = vmatpush1.msra.mxu0 0.0
    %1272 = vmatprep.subr.mxu0 0.0
    %1273 = vmatpush1.msra.mxu0 0.0
    %1274 = vmatprep.subr.mxu0 0.0
    %1275 = vmatpush1.msra.mxu0 0.0
    %1276 = vmatprep.subr.mxu0 0.0
    %1277 = vmatpush1.msra.mxu0 0.0
    %1278 = vmatprep.subr.mxu0 0.0
    %1279 = vmatpush1.msra.mxu0 0.0
    %1280 = vmatprep.subr.mxu0 0.0
    %1281 = vmatpush1.msra.mxu0 0.0
    %1282 = vmatprep.subr.mxu0 0.0
    %1283 = vmatpush1.msra.mxu0 0.0
    %1284 = vmatprep.subr.mxu0 0.0
    %1285 = vmatpush1.msra.mxu0 0.0
    %1286 = vmatprep.subr.mxu0 0.0
    %1287 = vmatpush1.msra.mxu0 0.0
    %1288 = vmatprep.subr.mxu0 0.0
    %1289 = vmatpush1.msra.mxu0 0.0
    %1290 = vmatprep.subr.mxu0 0.0
    %1291 = vmatpush1.msra.mxu0 0.0
    %1292 = vmatprep.subr.mxu0 0.0
    %1293 = vmatpush1.msra.mxu0 0.0
    %1294 = vmatprep.subr.mxu0 0.0
    %1295 = vmatpush1.msra.mxu0 0.0
    %1296 = vmatprep.subr.mxu0 0.0
    %1297 = vmatpush1.msra.mxu0 0.0
    %1298 = vmatprep.subr.mxu0 0.0
    %1299 = vmatpush1.msra.mxu0 0.0
    %1300 = vmatprep.subr.mxu0 0.0
    %1301 = vmatpush1.msra.mxu0 0.0
    %1302 = vmatprep.subr.mxu0 0.0
    %1303 = vmatpush1.msra.mxu0 0.0
    %1304 = vmatprep.subr.mxu0 0.0
    %1305 = vmatpush1.msra.mxu0 0.0
    %1306 = vmatprep.subr.mxu0 0.0
    %1307 = vmatpush1.msra.mxu0 0.0
    %1308 = vmatprep.subr.mxu0 0.0
    %1309 = vmatpush1.msra.mxu0 0.0
    %1310 = vmatprep.mubr.f32.mxu0 0.0
    %1311 = vmatmul.mubr.f32.gmra.mrb[0].mxu0 %v1242
    %v1312 = vpop.f32.mrb[0].mxu0
    %v1313 = vadd.f32 0.0, %v1312
    %v1314 = vpop.f32.mrb[0].mxu0
    %v1315 = vadd.f32 0.0, %v1314
    %1316 = vmatprep.mubr.f32.mxu0 0.0
    %1317 = vmatmul.mubr.f32.gmra.mrb[0].mxu0 %v1244
    %v1318 = vpop.f32.mrb[0].mxu0
    %v1319 = vadd.f32 0.0, %v1318
    %v1320 = vpop.f32.mrb[0].mxu0
    %v1321 = vadd.f32 0.0, %v1320
    %1322 = vdwg.mxu0
    %v1323 = vadd.f32 %v1230, %v1313
    %v1324 = vadd.f32 %v1231, %v1315
    %v1325 = vadd.f32 %v1234, %v1319
    %v1326 = vadd.f32 %v1235, %v1321
    %v1327 = vtanh.pop %v1323
    %v1328 = vtanh.pop %v1324
    %v1329 = vtanh.pop %v1325
    %v1330 = vtanh.pop %v1326
    %v1331 = vxor.u32 %v1323, 2147483648
    %v1332 = vxor.u32 %v1324, 2147483648
    %v1333 = vxor.u32 %v1325, 2147483648
    %v1334 = vxor.u32 %v1326, 2147483648
    %v1335 = vmul.f32 %v1331, 1.442695
    %v1336 = vpow.pop %v1335
    %v1337 = vmul.f32 %v1332, 1.442695
    %v1338 = vpow.pop %v1337
    %v1339 = vmul.f32 %v1333, 1.442695
    %v1340 = vpow.pop %v1339
    %v1341 = vmul.f32 %v1334, 1.442695
    %v1342 = vpow.pop %v1341
    %v1343 = vadd.f32 %v1336, 1.0
    %v1344 = vadd.f32 %v1338, 1.0
    %v1345 = vadd.f32 %v1340, 1.0
    %v1346 = vadd.f32 %v1342, 1.0
    %v1347 = vrcp.pop %v1343
    %v1348 = vmul.f32 1.0, %v1347
    %v1349 = vrcp.pop %v1344
    %v1350 = vmul.f32 1.0, %v1349
    %v1351 = vrcp.pop %v1345
    %v1352 = vmul.f32 1.0, %v1351
    %v1353 = vrcp.pop %v1346
    %v1354 = vmul.f32 1.0, %v1353
    %v1355 = vsel %vm434, %v1327, %v1348
    %v1356 = vsel %vm435, %v1328, %v1350
    %v1357 = vsel %vm434, %v1329, %v1352
    %v1358 = vsel %vm435, %v1330, %v1354
    %v1359 = vsel %vm581, %v1355, %v1356
    %v1360 = vsel %vm582, %v1357, %v1358
    %v1361 = vmul.f32 %v1359, %v1226
    %v1362 = vmul.f32 %v1360, %v1227
    %1365 = vrot.lane.b32.xlu0 %v1359, 64
    %v1366 = vpop.permute.xlu0 %1365
    %1367 = vrot.lane.b32.xlu0 %v1360, 64
    %v1368 = vpop.permute.xlu0 %1367
    %v1371 = vmul.f32 %v1359, %v1366
    %v1372 = vmul.f32 %v1360, %v1368
    %1375 = vrot.lane.b32.xlu0 %v1371, 32
    %v1376 = vpop.permute.xlu0 %1375
    %1377 = vrot.lane.b32.xlu0 %v1372, 32
    %v1378 = vpop.permute.xlu0 %1377
    %v1381 = vadd.f32 %v1361, %v1376
    %v1382 = vadd.f32 %v1362, %v1378
    %v1383 = vtanh.pop %v1381
    %v1384 = vtanh.pop %v1382
    %1387 = vrot.lane.b32.xlu0 %v1383, 64
    %v1388 = vpop.permute.xlu0 %1387
    %1389 = vrot.lane.b32.xlu0 %v1384, 64
    %v1390 = vpop.permute.xlu0 %1389
    %v1393 = vmul.f32 %v1359, %v1388
    %v1394 = vmul.f32 %v1360, %v1390
    %s1395 = sadd.s32 %s627, 4
    %s1396 = ssub.s32 3, %s627
    %v1397 = vstv %s1395
    %v1398 = vstv %s1396
    %v1399 = vsel %vm401, %v1397, %v1398
    %v1400 = vsel %vm402, %v1397, %v1398
    %vm1401 = vcmp.lt.s32.totalorder %v1399, %v397
    %vm1402 = vcmp.lt.s32.totalorder %v1400, %v397
    %v1403 = vsel %vm1401, 1, 0
    %v1404 = vsel %vm1402, 1, 0
    %1405 = vset.pattern.permute.xlu0 0
    %1406 = vperm.xlu0 %1405, %v1403
    %v1407 = vpop.permute.xlu0 %1406
    %1408 = vset.pattern.permute.xlu0 0
    %1409 = vperm.xlu0 %1408, %v1404
    %v1410 = vpop.permute.xlu0 %1409
    %vm1411 = vcmp.eq.s32.totalorder %v1407, 1
    %vm1412 = vcmp.eq.s32.totalorder %v1410, 1
    %v1413 = vsel %vm1411, %v1393, %v1224
    %v1414 = vsel %vm1412, %v1394, %v1225
    %v1415 = vsel %vm1411, %v1381, %v1226
    %v1416 = vsel %vm1412, %v1382, %v1227
    %s1417 = smul.addr %s851, 8
    %s1418 = scalar_lea.vmem [#allocation2], %s1417
    %v1419 = vld [vmem:[%s1418] sm:$0xff]
    %v1420 = vld [vmem:[%s1418 + $0x8] sm:$0xff]
    %s1421 = smul.addr %s846, 8
    %s1422 = scalar_lea.vmem [#allocation3], %s1421
    %v1423 = vld [vmem:[%s1422] sm:$0xff]
    %v1424 = vld [vmem:[%s1422 + $0x8] sm:$0xff]
    %1427 = vrot.lane.b32.xlu0 %v1413, 32
    %v1428 = vpop.permute.xlu0 %1427
    %1429 = vrot.lane.b32.xlu0 %v1414, 32
    %v1430 = vpop.permute.xlu0 %1429
    %v1431 = vsel %vm459, %v1428, 0
    %v1433 = vsel %vm459, %v1430, 0
    %1435 = vmatprep.subr.mxu0 %v390
    %1436 = vmatpush1.msra.mxu0 %v389
    %1437 = vmatprep.subr.mxu0 %v392
    %1438 = vmatpush1.msra.mxu0 %v391
    %1439 = vmatprep.subr.mxu0 %v394
    %1440 = vmatpush1.msra.mxu0 %v393
    %1441 = vmatprep.subr.mxu0 %v396
    %1442 = vmatpush1.msra.mxu0 %v395
    %1443 = vmatprep.subr.mxu0 0.0
    %1444 = vmatpush1.msra.mxu0 0.0
    %1445 = vmatprep.subr.mxu0 0.0
    %1446 = vmatpush1.msra.mxu0 0.0
    %1447 = vmatprep.subr.mxu0 0.0
    %1448 = vmatpush1.msra.mxu0 0.0
    %1449 = vmatprep.subr.mxu0 0.0
    %1450 = vmatpush1.msra.mxu0 0.0
    %1451 = vmatprep.subr.mxu0 0.0
    %1452 = vmatpush1.msra.mxu0 0.0
    %1453 = vmatprep.subr.mxu0 0.0
    %1454 = vmatpush1.msra.mxu0 0.0
    %1455 = vmatprep.subr.mxu0 0.0
    %1456 = vmatpush1.msra.mxu0 0.0
    %1457 = vmatprep.subr.mxu0 0.0
    %1458 = vmatpush1.msra.mxu0 0.0
    %1459 = vmatprep.subr.mxu0 0.0
    %1460 = vmatpush1.msra.mxu0 0.0
    %1461 = vmatprep.subr.mxu0 0.0
    %1462 = vmatpush1.msra.mxu0 0.0
    %1463 = vmatprep.subr.mxu0 0.0
    %1464 = vmatpush1.msra.mxu0 0.0
    %1465 = vmatprep.subr.mxu0 0.0
    %1466 = vmatpush1.msra.mxu0 0.0
    %1467 = vmatprep.subr.mxu0 0.0
    %1468 = vmatpush1.msra.mxu0 0.0
    %1469 = vmatprep.subr.mxu0 0.0
    %1470 = vmatpush1.msra.mxu0 0.0
    %1471 = vmatprep.subr.mxu0 0.0
    %1472 = vmatpush1.msra.mxu0 0.0
    %1473 = vmatprep.subr.mxu0 0.0
    %1474 = vmatpush1.msra.mxu0 0.0
    %1475 = vmatprep.subr.mxu0 0.0
    %1476 = vmatpush1.msra.mxu0 0.0
    %1477 = vmatprep.subr.mxu0 0.0
    %1478 = vmatpush1.msra.mxu0 0.0
    %1479 = vmatprep.subr.mxu0 0.0
    %1480 = vmatpush1.msra.mxu0 0.0
    %1481 = vmatprep.subr.mxu0 0.0
    %1482 = vmatpush1.msra.mxu0 0.0
    %1483 = vmatprep.subr.mxu0 0.0
    %1484 = vmatpush1.msra.mxu0 0.0
    %1485 = vmatprep.subr.mxu0 0.0
    %1486 = vmatpush1.msra.mxu0 0.0
    %1487 = vmatprep.subr.mxu0 0.0
    %1488 = vmatpush1.msra.mxu0 0.0
    %1489 = vmatprep.subr.mxu0 0.0
    %1490 = vmatpush1.msra.mxu0 0.0
    %1491 = vmatprep.subr.mxu0 0.0
    %1492 = vmatpush1.msra.mxu0 0.0
    %1493 = vmatprep.subr.mxu0 0.0
    %1494 = vmatpush1.msra.mxu0 0.0
    %1495 = vmatprep.subr.mxu0 0.0
    %1496 = vmatpush1.msra.mxu0 0.0
    %1497 = vmatprep.subr.mxu0 0.0
    %1498 = vmatpush1.msra.mxu0 0.0
    %1499 = vmatprep.mubr.f32.mxu0 0.0
    %1500 = vmatmul.mubr.f32.gmra.mrb[0].mxu0 %v1431
    %v1501 = vpop.f32.mrb[0].mxu0
    %v1502 = vadd.f32 0.0, %v1501
    %v1503 = vpop.f32.mrb[0].mxu0
    %v1504 = vadd.f32 0.0, %v1503
    %1505 = vmatprep.mubr.f32.mxu0 0.0
    %1506 = vmatmul.mubr.f32.gmra.mrb[0].mxu0 %v1433
    %v1507 = vpop.f32.mrb[0].mxu0
    %v1508 = vadd.f32 0.0, %v1507
    %v1509 = vpop.f32.mrb[0].mxu0
    %v1510 = vadd.f32 0.0, %v1509
    %1511 = vdwg.mxu0
    %v1512 = vadd.f32 %v1419, %v1502
    %v1513 = vadd.f32 %v1420, %v1504
    %v1514 = vadd.f32 %v1423, %v1508
    %v1515 = vadd.f32 %v1424, %v1510
    %v1516 = vtanh.pop %v1512
    %v1517 = vtanh.pop %v1513
    %v1518 = vtanh.pop %v1514
    %v1519 = vtanh.pop %v1515
    %v1520 = vxor.u32 %v1512, 2147483648
    %v1521 = vxor.u32 %v1513, 2147483648
    %v1522 = vxor.u32 %v1514, 2147483648
    %v1523 = vxor.u32 %v1515, 2147483648
    %v1524 = vmul.f32 %v1520, 1.442695
    %v1525 = vpow.pop %v1524
    %v1526 = vmul.f32 %v1521, 1.442695
    %v1527 = vpow.pop %v1526
    %v1528 = vmul.f32 %v1522, 1.442695
    %v1529 = vpow.pop %v1528
    %v1530 = vmul.f32 %v1523, 1.442695
    %v1531 = vpow.pop %v1530
    %v1532 = vadd.f32 %v1525, 1.0
    %v1533 = vadd.f32 %v1527, 1.0
    %v1534 = vadd.f32 %v1529, 1.0
    %v1535 = vadd.f32 %v1531, 1.0
    %v1536 = vrcp.pop %v1532
    %v1537 = vmul.f32 1.0, %v1536
    %v1538 = vrcp.pop %v1533
    %v1539 = vmul.f32 1.0, %v1538
    %v1540 = vrcp.pop %v1534
    %v1541 = vmul.f32 1.0, %v1540
    %v1542 = vrcp.pop %v1535
    %v1543 = vmul.f32 1.0, %v1542
    %v1544 = vsel %vm434, %v1516, %v1537
    %v1545 = vsel %vm435, %v1517, %v1539
    %v1546 = vsel %vm434, %v1518, %v1541
    %v1547 = vsel %vm435, %v1519, %v1543
    %v1548 = vsel %vm581, %v1544, %v1545
    %v1549 = vsel %vm582, %v1546, %v1547
    %v1550 = vmul.f32 %v1548, %v1415
    %v1551 = vmul.f32 %v1549, %v1416
    %1554 = vrot.lane.b32.xlu0 %v1548, 64
    %v1555 = vpop.permute.xlu0 %1554
    %1556 = vrot.lane.b32.xlu0 %v1549, 64
    %v1557 = vpop.permute.xlu0 %1556
    %v1560 = vmul.f32 %v1548, %v1555
    %v1561 = vmul.f32 %v1549, %v1557
    %1564 = vrot.lane.b32.xlu0 %v1560, 32
    %v1565 = vpop.permute.xlu0 %1564
    %1566 = vrot.lane.b32.xlu0 %v1561, 32
    %v1567 = vpop.permute.xlu0 %1566
    %v1570 = vadd.f32 %v1550, %v1565
    %v1571 = vadd.f32 %v1551, %v1567
    %v1572 = vtanh.pop %v1570
    %v1573 = vtanh.pop %v1571
    %1576 = vrot.lane.b32.xlu0 %v1572, 64
    %v1577 = vpop.permute.xlu0 %1576
    %1578 = vrot.lane.b32.xlu0 %v1573, 64
    %v1579 = vpop.permute.xlu0 %1578
    %v1582 = vmul.f32 %v1548, %v1577
    %v1583 = vmul.f32 %v1549, %v1579
    %s1584 = sadd.s32 %s627, 5
    %s1585 = ssub.s32 2, %s627
    %v1586 = vstv %s1584
    %v1587 = vstv %s1585
    %v1588 = vsel %vm401, %v1586, %v1587
    %v1589 = vsel %vm402, %v1586, %v1587
    %vm1590 = vcmp.lt.s32.totalorder %v1588, %v397
    %vm1591 = vcmp.lt.s32.totalorder %v1589, %v397
    %v1592 = vsel %vm1590, 1, 0
    %v1593 = vsel %vm1591, 1, 0
    %1594 = vset.pattern.permute.xlu0 0
    %1595 = vperm.xlu0 %1594, %v1592
    %v1596 = vpop.permute.xlu0 %1595
    %1597 = vset.pattern.permute.xlu0 0
    %1598 = vperm.xlu0 %1597, %v1593
    %v1599 = vpop.permute.xlu0 %1598
    %vm1600 = vcmp.eq.s32.totalorder %v1596, 1
    %vm1601 = vcmp.eq.s32.totalorder %v1599, 1
    %v1602 = vsel %vm1600, %v1582, %v1413
    %v1603 = vsel %vm1601, %v1583, %v1414
    %v1604 = vsel %vm1600, %v1570, %v1415
    %v1605 = vsel %vm1601, %v1571, %v1416
    %s1606 = smul.addr %s660, 8
    %s1607 = scalar_lea.vmem [#allocation2], %s1606
    %v1608 = vld [vmem:[%s1607] sm:$0xff]
    %v1609 = vld [vmem:[%s1607 + $0x8] sm:$0xff]
    %s1610 = smul.addr %s655, 8
    %s1611 = scalar_lea.vmem [#allocation3], %s1610
    %v1612 = vld [vmem:[%s1611] sm:$0xff]
    %v1613 = vld [vmem:[%s1611 + $0x8] sm:$0xff]
    %1616 = vrot.lane.b32.xlu0 %v1602, 32
    %v1617 = vpop.permute.xlu0 %1616
    %1618 = vrot.lane.b32.xlu0 %v1603, 32
    %v1619 = vpop.permute.xlu0 %1618
    %v1620 = vsel %vm459, %v1617, 0
    %v1622 = vsel %vm459, %v1619, 0
    %1624 = vmatprep.subr.mxu0 %v390
    %1625 = vmatpush1.msra.mxu0 %v389
    %1626 = vmatprep.subr.mxu0 %v392
    %1627 = vmatpush1.msra.mxu0 %v391
    %1628 = vmatprep.subr.mxu0 %v394
    %1629 = vmatpush1.msra.mxu0 %v393
    %1630 = vmatprep.subr.mxu0 %v396
    %1631 = vmatpush1.msra.mxu0 %v395
    %1632 = vmatprep.subr.mxu0 0.0
    %1633 = vmatpush1.msra.mxu0 0.0
    %1634 = vmatprep.subr.mxu0 0.0
    %1635 = vmatpush1.msra.mxu0 0.0
    %1636 = vmatprep.subr.mxu0 0.0
    %1637 = vmatpush1.msra.mxu0 0.0
    %1638 = vmatprep.subr.mxu0 0.0
    %1639 = vmatpush1.msra.mxu0 0.0
    %1640 = vmatprep.subr.mxu0 0.0
    %1641 = vmatpush1.msra.mxu0 0.0
    %1642 = vmatprep.subr.mxu0 0.0
    %1643 = vmatpush1.msra.mxu0 0.0
    %1644 = vmatprep.subr.mxu0 0.0
    %1645 = vmatpush1.msra.mxu0 0.0
    %1646 = vmatprep.subr.mxu0 0.0
    %1647 = vmatpush1.msra.mxu0 0.0
    %1648 = vmatprep.subr.mxu0 0.0
    %1649 = vmatpush1.msra.mxu0 0.0
    %1650 = vmatprep.subr.mxu0 0.0
    %1651 = vmatpush1.msra.mxu0 0.0
    %1652 = vmatprep.subr.mxu0 0.0
    %1653 = vmatpush1.msra.mxu0 0.0
    %1654 = vmatprep.subr.mxu0 0.0
    %1655 = vmatpush1.msra.mxu0 0.0
    %1656 = vmatprep.subr.mxu0 0.0
    %1657 = vmatpush1.msra.mxu0 0.0
    %1658 = vmatprep.subr.mxu0 0.0
    %1659 = vmatpush1.msra.mxu0 0.0
    %1660 = vmatprep.subr.mxu0 0.0
    %1661 = vmatpush1.msra.mxu0 0.0
    %1662 = vmatprep.subr.mxu0 0.0
    %1663 = vmatpush1.msra.mxu0 0.0
    %1664 = vmatprep.subr.mxu0 0.0
    %1665 = vmatpush1.msra.mxu0 0.0
    %1666 = vmatprep.subr.mxu0 0.0
    %1667 = vmatpush1.msra.mxu0 0.0
    %1668 = vmatprep.subr.mxu0 0.0
    %1669 = vmatpush1.msra.mxu0 0.0
    %1670 = vmatprep.subr.mxu0 0.0
    %1671 = vmatpush1.msra.mxu0 0.0
    %1672 = vmatprep.subr.mxu0 0.0
    %1673 = vmatpush1.msra.mxu0 0.0
    %1674 = vmatprep.subr.mxu0 0.0
    %1675 = vmatpush1.msra.mxu0 0.0
    %1676 = vmatprep.subr.mxu0 0.0
    %1677 = vmatpush1.msra.mxu0 0.0
    %1678 = vmatprep.subr.mxu0 0.0
    %1679 = vmatpush1.msra.mxu0 0.0
    %1680 = vmatprep.subr.mxu0 0.0
    %1681 = vmatpush1.msra.mxu0 0.0
    %1682 = vmatprep.subr.mxu0 0.0
    %1683 = vmatpush1.msra.mxu0 0.0
    %1684 = vmatprep.subr.mxu0 0.0
    %1685 = vmatpush1.msra.mxu0 0.0
    %1686 = vmatprep.subr.mxu0 0.0
    %1687 = vmatpush1.msra.mxu0 0.0
    %1688 = vmatprep.mubr.f32.mxu0 0.0
    %1689 = vmatmul.mubr.f32.gmra.mrb[0].mxu0 %v1620
    %v1690 = vpop.f32.mrb[0].mxu0
    %v1691 = vadd.f32 0.0, %v1690
    %v1692 = vpop.f32.mrb[0].mxu0
    %v1693 = vadd.f32 0.0, %v1692
    %1694 = vmatprep.mubr.f32.mxu0 0.0
    %1695 = vmatmul.mubr.f32.gmra.mrb[0].mxu0 %v1622
    %v1696 = vpop.f32.mrb[0].mxu0
    %v1697 = vadd.f32 0.0, %v1696
    %v1698 = vpop.f32.mrb[0].mxu0
    %v1699 = vadd.f32 0.0, %v1698
    %1700 = vdwg.mxu0
    %v1701 = vadd.f32 %v1608, %v1691
    %v1702 = vadd.f32 %v1609, %v1693
    %v1703 = vadd.f32 %v1612, %v1697
    %v1704 = vadd.f32 %v1613, %v1699
    %v1705 = vtanh.pop %v1701
    %v1706 = vtanh.pop %v1702
    %v1707 = vtanh.pop %v1703
    %v1708 = vtanh.pop %v1704
    %v1709 = vxor.u32 %v1701, 2147483648
    %v1710 = vxor.u32 %v1702, 2147483648
    %v1711 = vxor.u32 %v1703, 2147483648
    %v1712 = vxor.u32 %v1704, 2147483648
    %v1713 = vmul.f32 %v1709, 1.442695
    %v1714 = vpow.pop %v1713
    %v1715 = vmul.f32 %v1710, 1.442695
    %v1716 = vpow.pop %v1715
    %v1717 = vmul.f32 %v1711, 1.442695
    %v1718 = vpow.pop %v1717
    %v1719 = vmul.f32 %v1712, 1.442695
    %v1720 = vpow.pop %v1719
    %v1721 = vadd.f32 %v1714, 1.0
    %v1722 = vadd.f32 %v1716, 1.0
    %v1723 = vadd.f32 %v1718, 1.0
    %v1724 = vadd.f32 %v1720, 1.0
    %v1725 = vrcp.pop %v1721
    %v1726 = vmul.f32 1.0, %v1725
    %v1727 = vrcp.pop %v1722
    %v1728 = vmul.f32 1.0, %v1727
    %v1729 = vrcp.pop %v1723
    %v1730 = vmul.f32 1.0, %v1729
    %v1731 = vrcp.pop %v1724
    %v1732 = vmul.f32 1.0, %v1731
    %v1733 = vsel %vm434, %v1705, %v1726
    %v1734 = vsel %vm435, %v1706, %v1728
    %v1735 = vsel %vm434, %v1707, %v1730
    %v1736 = vsel %vm435, %v1708, %v1732
    %v1737 = vsel %vm581, %v1733, %v1734
    %v1738 = vsel %vm582, %v1735, %v1736
    %v1739 = vmul.f32 %v1737, %v1604
    %v1740 = vmul.f32 %v1738, %v1605
    %1743 = vrot.lane.b32.xlu0 %v1737, 64
    %v1744 = vpop.permute.xlu0 %1743
    %1745 = vrot.lane.b32.xlu0 %v1738, 64
    %v1746 = vpop.permute.xlu0 %1745
    %v1749 = vmul.f32 %v1737, %v1744
    %v1750 = vmul.f32 %v1738, %v1746
    %1753 = vrot.lane.b32.xlu0 %v1749, 32
    %v1754 = vpop.permute.xlu0 %1753
    %1755 = vrot.lane.b32.xlu0 %v1750, 32
    %v1756 = vpop.permute.xlu0 %1755
    %v1759 = vadd.f32 %v1739, %v1754
    %v1760 = vadd.f32 %v1740, %v1756
    %v1761 = vtanh.pop %v1759
    %v1762 = vtanh.pop %v1760
    %1765 = vrot.lane.b32.xlu0 %v1761, 64
    %v1766 = vpop.permute.xlu0 %1765
    %1767 = vrot.lane.b32.xlu0 %v1762, 64
    %v1768 = vpop.permute.xlu0 %1767
    %v1771 = vmul.f32 %v1737, %v1766
    %v1772 = vmul.f32 %v1738, %v1768
    %s1773 = sadd.s32 %s627, 6
    %s1774 = ssub.s32 1, %s627
    %v1775 = vstv %s1773
    %v1776 = vstv %s1774
    %v1777 = vsel %vm401, %v1775, %v1776
    %v1778 = vsel %vm402, %v1775, %v1776
    %vm1779 = vcmp.lt.s32.totalorder %v1777, %v397
    %vm1780 = vcmp.lt.s32.totalorder %v1778, %v397
    %v1781 = vsel %vm1779, 1, 0
    %v1782 = vsel %vm1780, 1, 0
    %1783 = vset.pattern.permute.xlu0 0
    %1784 = vperm.xlu0 %1783, %v1781
    %v1785 = vpop.permute.xlu0 %1784
    %1786 = vset.pattern.permute.xlu0 0
    %1787 = vperm.xlu0 %1786, %v1782
    %v1788 = vpop.permute.xlu0 %1787
    %vm1789 = vcmp.eq.s32.totalorder %v1785, 1
    %vm1790 = vcmp.eq.s32.totalorder %v1788, 1
    %v1791 = vsel %vm1789, %v1771, %v1602
    %v1792 = vsel %vm1790, %v1772, %v1603
    %v1793 = vsel %vm1789, %v1759, %v1604
    %v1794 = vsel %vm1790, %v1760, %v1605
    %s1795 = smul.addr %s454, 8
    %s1796 = scalar_lea.vmem [#allocation2], %s1795
    %v1797 = vld [vmem:[%s1796] sm:$0xff]
    %v1798 = vld [vmem:[%s1796 + $0x8] sm:$0xff]
    %s1799 = smul.addr %s449, 8
    %s1800 = scalar_lea.vmem [#allocation3], %s1799
    %v1801 = vld [vmem:[%s1800] sm:$0xff]
    %v1802 = vld [vmem:[%s1800 + $0x8] sm:$0xff]
    %1805 = vrot.lane.b32.xlu0 %v1791, 32
    %v1806 = vpop.permute.xlu0 %1805
    %1807 = vrot.lane.b32.xlu0 %v1792, 32
    %v1808 = vpop.permute.xlu0 %1807
    %v1809 = vsel %vm459, %v1806, 0
    %v1811 = vsel %vm459, %v1808, 0
    %1813 = vmatprep.subr.mxu0 %v390
    %1814 = vmatpush1.msra.mxu0 %v389
    %1815 = vmatprep.subr.mxu0 %v392
    %1816 = vmatpush1.msra.mxu0 %v391
    %1817 = vmatprep.subr.mxu0 %v394
    %1818 = vmatpush1.msra.mxu0 %v393
    %1819 = vmatprep.subr.mxu0 %v396
    %1820 = vmatpush1.msra.mxu0 %v395
    %1821 = vmatprep.subr.mxu0 0.0
    %1822 = vmatpush1.msra.mxu0 0.0
    %1823 = vmatprep.subr.mxu0 0.0
    %1824 = vmatpush1.msra.mxu0 0.0
    %1825 = vmatprep.subr.mxu0 0.0
    %1826 = vmatpush1.msra.mxu0 0.0
    %1827 = vmatprep.subr.mxu0 0.0
    %1828 = vmatpush1.msra.mxu0 0.0
    %1829 = vmatprep.subr.mxu0 0.0
    %1830 = vmatpush1.msra.mxu0 0.0
    %1831 = vmatprep.subr.mxu0 0.0
    %1832 = vmatpush1.msra.mxu0 0.0
    %1833 = vmatprep.subr.mxu0 0.0
    %1834 = vmatpush1.msra.mxu0 0.0
    %1835 = vmatprep.subr.mxu0 0.0
    %1836 = vmatpush1.msra.mxu0 0.0
    %1837 = vmatprep.subr.mxu0 0.0
    %1838 = vmatpush1.msra.mxu0 0.0
    %1839 = vmatprep.subr.mxu0 0.0
    %1840 = vmatpush1.msra.mxu0 0.0
    %1841 = vmatprep.subr.mxu0 0.0
    %1842 = vmatpush1.msra.mxu0 0.0
    %1843 = vmatprep.subr.mxu0 0.0
    %1844 = vmatpush1.msra.mxu0 0.0
    %1845 = vmatprep.subr.mxu0 0.0
    %1846 = vmatpush1.msra.mxu0 0.0
    %1847 = vmatprep.subr.mxu0 0.0
    %1848 = vmatpush1.msra.mxu0 0.0
    %1849 = vmatprep.subr.mxu0 0.0
    %1850 = vmatpush1.msra.mxu0 0.0
    %1851 = vmatprep.subr.mxu0 0.0
    %1852 = vmatpush1.msra.mxu0 0.0
    %1853 = vmatprep.subr.mxu0 0.0
    %1854 = vmatpush1.msra.mxu0 0.0
    %1855 = vmatprep.subr.mxu0 0.0
    %1856 = vmatpush1.msra.mxu0 0.0
    %1857 = vmatprep.subr.mxu0 0.0
    %1858 = vmatpush1.msra.mxu0 0.0
    %1859 = vmatprep.subr.mxu0 0.0
    %1860 = vmatpush1.msra.mxu0 0.0
    %1861 = vmatprep.subr.mxu0 0.0
    %1862 = vmatpush1.msra.mxu0 0.0
    %1863 = vmatprep.subr.mxu0 0.0
    %1864 = vmatpush1.msra.mxu0 0.0
    %1865 = vmatprep.subr.mxu0 0.0
    %1866 = vmatpush1.msra.mxu0 0.0
    %1867 = vmatprep.subr.mxu0 0.0
    %1868 = vmatpush1.msra.mxu0 0.0
    %1869 = vmatprep.subr.mxu0 0.0
    %1870 = vmatpush1.msra.mxu0 0.0
    %1871 = vmatprep.subr.mxu0 0.0
    %1872 = vmatpush1.msra.mxu0 0.0
    %1873 = vmatprep.subr.mxu0 0.0
    %1874 = vmatpush1.msra.mxu0 0.0
    %1875 = vmatprep.subr.mxu0 0.0
    %1876 = vmatpush1.msra.mxu0 0.0
    %1877 = vmatprep.mubr.f32.mxu0 0.0
    %1878 = vmatmul.mubr.f32.gmra.mrb[0].mxu0 %v1809
    %v1879 = vpop.f32.mrb[0].mxu0
    %v1880 = vadd.f32 0.0, %v1879
    %v1881 = vpop.f32.mrb[0].mxu0
    %v1882 = vadd.f32 0.0, %v1881
    %1883 = vmatprep.mubr.f32.mxu0 0.0
    %1884 = vmatmul.mubr.f32.gmra.mrb[0].mxu0 %v1811
    %v1885 = vpop.f32.mrb[0].mxu0
    %v1886 = vadd.f32 0.0, %v1885
    %v1887 = vpop.f32.mrb[0].mxu0
    %v1888 = vadd.f32 0.0, %v1887
    %1889 = vdwg.mxu0
    %v1890 = vadd.f32 %v1797, %v1880
    %v1891 = vadd.f32 %v1798, %v1882
    %v1892 = vadd.f32 %v1801, %v1886
    %v1893 = vadd.f32 %v1802, %v1888
    %v1894 = vtanh.pop %v1890
    %v1895 = vtanh.pop %v1891
    %v1896 = vtanh.pop %v1892
    %v1897 = vtanh.pop %v1893
    %v1898 = vxor.u32 %v1890, 2147483648
    %v1899 = vxor.u32 %v1891, 2147483648
    %v1900 = vxor.u32 %v1892, 2147483648
    %v1901 = vxor.u32 %v1893, 2147483648
    %v1902 = vmul.f32 %v1898, 1.442695
    %v1903 = vpow.pop %v1902
    %v1904 = vmul.f32 %v1899, 1.442695
    %v1905 = vpow.pop %v1904
    %v1906 = vmul.f32 %v1900, 1.442695
    %v1907 = vpow.pop %v1906
    %v1908 = vmul.f32 %v1901, 1.442695
    %v1909 = vpow.pop %v1908
    %v1910 = vadd.f32 %v1903, 1.0
    %v1911 = vadd.f32 %v1905, 1.0
    %v1912 = vadd.f32 %v1907, 1.0
    %v1913 = vadd.f32 %v1909, 1.0
    %v1914 = vrcp.pop %v1910
    %v1915 = vmul.f32 1.0, %v1914
    %v1916 = vrcp.pop %v1911
    %v1917 = vmul.f32 1.0, %v1916
    %v1918 = vrcp.pop %v1912
    %v1919 = vmul.f32 1.0, %v1918
    %v1920 = vrcp.pop %v1913
    %v1921 = vmul.f32 1.0, %v1920
    %v1922 = vsel %vm434, %v1894, %v1915
    %v1923 = vsel %vm435, %v1895, %v1917
    %v1924 = vsel %vm434, %v1896, %v1919
    %v1925 = vsel %vm435, %v1897, %v1921
    %v1926 = vsel %vm581, %v1922, %v1923
    %v1927 = vsel %vm582, %v1924, %v1925
    %v1928 = vmul.f32 %v1926, %v1793
    %v1929 = vmul.f32 %v1927, %v1794
    %1932 = vrot.lane.b32.xlu0 %v1926, 64
    %v1933 = vpop.permute.xlu0 %1932
    %1934 = vrot.lane.b32.xlu0 %v1927, 64
    %v1935 = vpop.permute.xlu0 %1934
    %v1938 = vmul.f32 %v1926, %v1933
    %v1939 = vmul.f32 %v1927, %v1935
    %1942 = vrot.lane.b32.xlu0 %v1938, 32
    %v1943 = vpop.permute.xlu0 %1942
    %1944 = vrot.lane.b32.xlu0 %v1939, 32
    %v1945 = vpop.permute.xlu0 %1944
    %v1948 = vadd.f32 %v1928, %v1943
    %v1949 = vadd.f32 %v1929, %v1945
    %v1950 = vtanh.pop %v1948
    %v1951 = vtanh.pop %v1949
    %1954 = vrot.lane.b32.xlu0 %v1950, 64
    %v1955 = vpop.permute.xlu0 %1954
    %1956 = vrot.lane.b32.xlu0 %v1951, 64
    %v1957 = vpop.permute.xlu0 %1956
    %v1960 = vmul.f32 %v1926, %v1955
    %v1961 = vmul.f32 %v1927, %v1957
    %s1962 = sadd.s32 %s627, 7
    %s1963 = ssub.s32 0, %s627
    %v1964 = vstv %s1962
    %v1965 = vstv %s1963
    %v1966 = vsel %vm401, %v1964, %v1965
    %v1967 = vsel %vm402, %v1964, %v1965
    %vm1968 = vcmp.lt.s32.totalorder %v1966, %v397
    %vm1969 = vcmp.lt.s32.totalorder %v1967, %v397
    %v1970 = vsel %vm1968, 1, 0
    %v1971 = vsel %vm1969, 1, 0
    %1972 = vset.pattern.permute.xlu0 0
    %1973 = vperm.xlu0 %1972, %v1970
    %v1974 = vpop.permute.xlu0 %1973
    %1975 = vset.pattern.permute.xlu0 0
    %1976 = vperm.xlu0 %1975, %v1971
    %v1977 = vpop.permute.xlu0 %1976
    %vm1978 = vcmp.eq.s32.totalorder %v1974, 1
    %vm1979 = vcmp.eq.s32.totalorder %v1977, 1
    %v1980 = vsel %vm1978, %v1960, %v1791
    %v1981 = vsel %vm1979, %v1961, %v1792
    %v1982 = vsel %vm1978, %v1948, %v1793
    %v1983 = vsel %vm1979, %v1949, %v1794
    %1986 = vrot.lane.b32.xlu0 %v1980, 32
    %v1987 = vpop.permute.xlu0 %1986
    %1988 = vrot.lane.b32.xlu0 %v1981, 32
    %v1989 = vpop.permute.xlu0 %1988
    %1992 = vst.msk [vmem:[#allocation4] sm:$0xff] %vm459, %v1987
    %1993 = vst.msk [vmem:[#allocation4 + $0x8] sm:$0xff] %vm459, %v1989
    %1996 = vrot.lane.b32.xlu0 %v1982, 96
    %v1997 = vpop.permute.xlu0 %1996
    %1998 = vrot.lane.b32.xlu0 %v1983, 96
    %v1999 = vpop.permute.xlu0 %1998
    %2002 = vst.msk [vmem:[#allocation5] sm:$0xff] %vm459, %v1997
    %2003 = vst.msk [vmem:[#allocation5 + $0x8] sm:$0xff] %vm459, %v1999
    // Predicated region
    $region30: #{tpu_custom_call.1} parent=1 // pred_check
      %p2004 = pneg %p436
    $region31: #{tpu_custom_call.1} parent=1 // pred_check_branch
      %2006 = sbr.rel (%p2004) target = $region33
    $region32: #{tpu_custom_call.1} parent=1 // pred_region
      %2007 = vrot.lane.b32.xlu0 %v1981, 64
      %v2008 = vpop.permute.xlu0 %2007
      %v2010 = vsel %vm459, %v1987, %v2008
      %vm2011 = vcmask 523264
      %2012 = vst.msk [vmem:[#allocation6] sm:$0xff] %vm2011, %v2010
    $region33: #{tpu_custom_call.1} parent=1 // pred_fallthru
      _
    // Predicated region
    $region34: #{tpu_custom_call.1} parent=1 // pred_check
      _
    $region35: #{tpu_custom_call.1} parent=1 // pred_check_branch
      %2014 = sbr.rel (0) target = $region37
    $region36: #{tpu_custom_call.1} parent=1 // pred_region
      %s2016 = ssub.s32 128, 128
      %2017 = vsyncadd [#allocation7], %s2016
      %s2019 = sshll.u32 [#allocation6], 4
      %s2020 = int_to_ptr.vmem [resolvable:$true] %s2019
      %2022 = dma.vmem_to_hbm [thread:$0]  %s2020, 128, %s6, [#allocation7]
    $region37: #{tpu_custom_call.1} parent=1 // pred_fallthru
      _
    // Predicated region
    $region38: #{tpu_custom_call.1} parent=1 // pred_check
      _
    $region39: #{tpu_custom_call.1} parent=1 // pred_check_branch
      %2024 = sbr.rel (0) target = $region41
    $region40: #{tpu_custom_call.1} parent=1 // pred_region
      %2025 = dma.done [#allocation7], 128
    $region41: #{tpu_custom_call.1} parent=1 // pred_fallthru
      _
    %2026 = vsyncpa [#allocation7], 1

</llo_original>
